<compile_context>
chip_gen: v7x
topology: tpu7x:2x2x1
jax: 0.10.0
libtpu: 0.0.40
codegen_flags: <defaults>
</compile_context>

<pallas_src>
import numpy as np
import jax
import jax.numpy as jnp
from jax import lax
from jax.experimental import pallas as pl
from jax.experimental.pallas import tpu as pltpu

# ----- small, module-consistent problem sizes -----
B = 2
H = W = 16          # image width/height   (options[2], options[3])
HW = H * W
VIEWS = 8           # options[0]
DETS = 16           # options[1]
VD = VIEWS * DETS
HID = 8             # hid_channels
KS = 3              # kernel_size
KK = KS * KS
PADC = 1            # padding (= (KS-1)//2)
DIMG = 1.0
DDET = 2.0          # options[5]
S2R = 500.0         # options[8]
D2R = 500.0         # options[9]


# ---------------------------------------------------------------------------
# Single fused Pallas kernel: fidelity_module + block2 CNN + residual ReLU
# ---------------------------------------------------------------------------
def iter_block_kernel(scal_ref, x_ref, proj_ref, at_ref, m_ref, mask_ref,
                      w1_ref, b1_ref, w2_ref, b2_ref, w3_ref, b3_ref, out_ref):
    weight = scal_ref[0]          # fidelity_module.weight (scalar)
    coef = scal_ref[1]            # FBP coef = pi / views

    x = x_ref[...]                                                    # (B, HW)

    # ---- block1: fidelity  (projection -> residual -> fused FBP) ----
    p_tmp = jnp.dot(x, at_ref[...], preferred_element_type=jnp.float32)   # (B, VD)
    recon = jnp.dot(proj_ref[...] - p_tmp, m_ref[...],
                    preferred_element_type=jnp.float32)                   # (B, HW)
    tmp1 = (weight * coef) * recon + x                                    # (B, HW)

    # ---- block2: conv(1->HID) relu conv(HID->HID) relu conv(HID->1) ----
    masks = mask_ref[...]                                                 # (KK, HW)

    def im2col(act):
        # act: (C*B, HW) -> (KK*C*B, HW) stacked 3x3 shifted windows.
        # Zero padding is realized with lane rolls + precomputed border masks,
        # keeping every access lane-dense (256 lanes) and unmasked.
        cols = []
        for k in range(KK):
            ky, kx = divmod(k, KS)
            off = (ky - PADC) * W + (kx - PADC)
            rolled = act if off == 0 else pltpu.roll(act, (-off) % HW, axis=1)
            cols.append(rolled * masks[k:k + 1, :])
        return jnp.concatenate(cols, axis=0)

    # conv1: one (HID*B, KK*B) @ (KK*B, HW) matmul (batch folded via kron(.,I_B))
    h = jnp.dot(w1_ref[...], im2col(x), preferred_element_type=jnp.float32)
    h = jnp.maximum(h + b1_ref[...], 0.0)                                 # (HID*B, HW)
    # conv2: one (HID*B, KK*HID*B) @ (KK*HID*B, HW) matmul
    h = jnp.dot(w2_ref[...], im2col(h), preferred_element_type=jnp.float32)
    h = jnp.maximum(h + b2_ref[...], 0.0)                                 # (HID*B, HW)
    # conv3: one (B, KK*HID*B) @ (KK*HID*B, HW) matmul
    tmp2 = jnp.dot(w3_ref[...], im2col(h),
                   preferred_element_type=jnp.float32) + b3_ref[...]      # (B, HW)

    # ---- output = relu(tmp1 + tmp2), lane-dense (B, HW) slab ----
    out_ref[...] = jnp.maximum(tmp1 + tmp2, 0.0)


# ---------------------------------------------------------------------------
# Parameter construction (deterministic, glue code)
# ---------------------------------------------------------------------------
def build_fbp_params(options):
    views = int(options[0]); dets = int(options[1])
    dDet = float(options[5]); s2r = float(options[8]); d2r = float(options[9])
    virdet = dDet * s2r / (s2r + d2r)

    idx = np.arange(2 * dets - 1)
    xs = idx - dets + 1
    xs_safe = np.where(xs == 0, 1, xs).astype(np.float64)
    filt = np.where(np.abs(xs) % 2 == 1,
                    -1.0 / (np.pi ** 2 * xs_safe ** 2 * virdet ** 2), 0.0)
    filt = np.where(xs == 0, 1.0 / (4.0 * virdet ** 2), filt).astype(np.float32)

    w = (np.arange(dets) - dets / 2.0 + 0.5) * virdet
    w = (s2r / np.sqrt(s2r ** 2 + w ** 2) * virdet).astype(np.float32)

    coef = np.float32(np.pi / views)

    # Toeplitz matrix equivalent to conv2d(p, filter, padding=(0, dets-1))
    di = np.arange(dets)
    F = filt[di[:, None] - di[None, :] + dets - 1].astype(np.float32)  # (d_in, d_out)
    return filt, w, F, coef, virdet


def build_system_matrix(views, dets, H_, W_, dImg, virdet):
    # deterministic pixel-driven parallel-beam system matrix (stand-in for ctlib)
    thetas = np.arange(views) * (np.pi / views)
    ys, xs = np.meshgrid(np.arange(H_), np.arange(W_), indexing="ij")
    px = (xs - (W_ - 1) / 2.0) * dImg
    py = ((H_ - 1) / 2.0 - ys) * dImg
    A = np.zeros((views, dets, H_ * W_), np.float64)
    pix = np.arange(H_ * W_)
    for v, th in enumerate(thetas):
        t = (px * np.cos(th) + py * np.sin(th)).reshape(-1)
        u = t / virdet + (dets - 1) / 2.0
        u0 = np.floor(u).astype(np.int64)
        frac = u - u0
        for ui, wgt in ((u0, 1.0 - frac), (u0 + 1, frac)):
            valid = (ui >= 0) & (ui < dets)
            np.add.at(A[v], (np.clip(ui, 0, dets - 1), pix), wgt * valid)
    return (A * dImg).reshape(views * dets, H_ * W_).astype(np.float32)


# ---------------------------------------------------------------------------
# Wrapper: Iter_block.forward  (one pallas_call, no grid)
# ---------------------------------------------------------------------------
def iter_block_forward(x, proj, prm):
    B_ = x.shape[0]
    x_flat = x.reshape(B_, HW)
    proj_flat = proj.reshape(B_, VD)
    scal = jnp.array([prm["fid_weight"], prm["coef"]], jnp.float32)

    out = pl.pallas_call(
        iter_block_kernel,
        out_shape=jax.ShapeDtypeStruct((B_, HW), jnp.float32),
        in_specs=[pl.BlockSpec(memory_space=pltpu.MemorySpace.SMEM)]
        + [pl.BlockSpec(memory_space=pltpu.MemorySpace.VMEM)] * 11,
        out_specs=pl.BlockSpec(memory_space=pltpu.MemorySpace.VMEM),
    )(scal, x_flat, proj_flat, prm["A_T"], prm["M"], prm["mask"],
      prm["w1k"], prm["b1r"], prm["w2k"], prm["b2r"], prm["w3k"], prm["b3r"])
    return out.reshape(B_, 1, H, W)


# ---------------------------------------------------------------------------
# Pure-JAX reference (unfused math, XLA ops) for correctness checking
# ---------------------------------------------------------------------------
def reference_forward(x, proj, prm):
    B_ = x.shape[0]
    x_flat = x.reshape(B_, HW)
    p_tmp = jnp.dot(x_flat, prm["A_T"], precision="highest")
    y_err = proj - p_tmp.reshape(B_, 1, VIEWS, DETS)
    p = y_err * prm["w_det"].reshape(1, 1, 1, DETS)
    filt = prm["filt_full"].reshape(1, 1, 1, 2 * DETS - 1)
    p = lax.conv_general_dilated(p, filt, (1, 1),
                                 [(0, 0), (DETS - 1, DETS - 1)],
                                 dimension_numbers=("NCHW", "OIHW", "NCHW"),
                                 precision="highest")
    recon = jnp.dot(p.reshape(B_, VD), prm["A"],
                    precision="highest") * prm["coef"]
    tmp1 = (prm["fid_weight"] * recon + x_flat).reshape(B_, 1, H, W)

    def conv(z, wgt, bias):
        return lax.conv_general_dilated(z, wgt, (1, 1),
                                        [(PADC, PADC), (PADC, PADC)],
                                        dimension_numbers=("NCHW", "OIHW", "NCHW"),
                                        precision="highest") + bias.reshape(1, -1, 1, 1)

    h = jax.nn.relu(conv(x, prm["w1"], prm["b1"]))
    h = jax.nn.relu(conv(h, prm["w2"], prm["b2"]))
    tmp2 = conv(h, prm["w3"], prm["b3"])
    return jax.nn.relu(tmp1 + tmp2)


# ---------------------------------------------------------------------------
if __name__ == "__main__":
    options = np.array([VIEWS, DETS, W, H, DIMG, DDET, 0.0, 2 * np.pi / VIEWS,
                        S2R, D2R, 0.0, 0.0], np.float32)
    filt_full, w_det, F, coef, virdet = build_fbp_params(options)
    A = build_system_matrix(VIEWS, DETS, H, W, DIMG, virdet)

    key = jax.random.PRNGKey(0)
    kx, kp, k1, k2, k3, kb1, kb2, kb3 = jax.random.split(key, 8)
    x = jax.random.normal(kx, (B, 1, H, W), jnp.float32)
    proj = jax.random.normal(kp, (B, 1, VIEWS, DETS), jnp.float32)

    w1 = 0.1 * jax.random.normal(k1, (HID, 1, KS, KS), jnp.float32)
    w2 = 0.1 * jax.random.normal(k2, (HID, HID, KS, KS), jnp.float32)
    w3 = 0.1 * jax.random.normal(k3, (1, HID, KS, KS), jnp.float32)
    b1 = 0.05 * jax.random.normal(kb1, (HID,), jnp.float32)
    b2 = 0.05 * jax.random.normal(kb2, (HID,), jnp.float32)
    b3 = 0.05 * jax.random.normal(kb3, (1,), jnp.float32)

    # ---- fused FBP matrix:  M = diag(w_full) @ BigF @ A    (V*D, H*W) ----
    w_full = np.tile(w_det.astype(np.float64), VIEWS)
    BigF = np.kron(np.eye(VIEWS), F.astype(np.float64))
    M = (w_full[:, None] * BigF) @ A.astype(np.float64)

    # ---- border masks for the 3x3 lane-roll im2col ----
    ys_idx, xs_idx = np.divmod(np.arange(HW), W)
    mask = np.zeros((KK, HW), np.float32)
    for k in range(KK):
        ky, kx_ = divmod(k, KS)
        dy, dx = ky - PADC, kx_ - PADC
        mask[k] = ((ys_idx + dy >= 0) & (ys_idx + dy < H) &
                   (xs_idx + dx >= 0) & (xs_idx + dx < W)).astype(np.float32)

    # ---- batch-folded conv weights:  kron(W_mat, I_B)  (one matmul per layer) ----
    I_B = np.eye(B, dtype=np.float32)
    w1_np, w2_np, w3_np = np.asarray(w1), np.asarray(w2), np.asarray(w3)
    b1_np, b2_np, b3_np = np.asarray(b1), np.asarray(b2), np.asarray(b3)
    W1_mat = w1_np.reshape(HID, KK)                                  # (HID, KK)
    W2_mat = w2_np.transpose(0, 2, 3, 1).reshape(HID, KK * HID)      # (HID, KK*HID)
    W3_mat = w3_np.transpose(0, 2, 3, 1).reshape(1, KK * HID)        # (1,   KK*HID)

    prm = {
        # fidelity / FBP parameters
        "A": jnp.asarray(A),                                   # (V*D, H*W)
        "A_T": jnp.asarray(np.ascontiguousarray(A.T)),         # (H*W, V*D)
        "M": jnp.asarray(M.astype(np.float32)),                # (V*D, H*W) fused FBP
        "w_det": jnp.asarray(w_det),                           # (D,)
        "filt_full": jnp.asarray(filt_full),                   # (2D-1,)
        "coef": jnp.float32(coef),
        "fid_weight": jnp.float32(0.25),                       # fidelity_module.weight
        # CNN parameters (PyTorch OIHW for reference) + kernel-friendly forms
        "w1": w1, "b1": b1, "w2": w2, "b2": b2, "w3": w3, "b3": b3,
        "mask": jnp.asarray(mask),                             # (KK, HW)
        "w1k": jnp.asarray(np.kron(W1_mat, I_B)),              # (HID*B, KK*B)
        "w2k": jnp.asarray(np.kron(W2_mat, I_B)),              # (HID*B, KK*HID*B)
        "w3k": jnp.asarray(np.kron(W3_mat, I_B)),              # (B,     KK*HID*B)
        "b1r": jnp.asarray(np.repeat(b1_np, B).reshape(HID * B, 1)),
        "b2r": jnp.asarray(np.repeat(b2_np, B).reshape(HID * B, 1)),
        "b3r": jnp.asarray(np.repeat(b3_np, B).reshape(B, 1)),
    }

    out = iter_block_forward(x, proj, prm)
    out = jax.block_until_ready(out)

    ref = reference_forward(x, proj, prm)
    np.testing.assert_allclose(np.asarray(out), np.asarray(ref),
                               rtol=5e-2, atol=5e-2)
    print("KERNEL_OK")
</pallas_src>

<mosaic_0001>
module attributes {stable_mosaic.version = 11 : i64} {
  func.func @iter_block_kernel(%arg0: memref<2xf32, #tpu.memory_space<smem>>, %arg1: memref<2x256xf32, #tpu.memory_space<vmem>>, %arg2: memref<2x128xf32, #tpu.memory_space<vmem>>, %arg3: memref<256x128xf32, #tpu.memory_space<vmem>>, %arg4: memref<128x256xf32, #tpu.memory_space<vmem>>, %arg5: memref<9x256xf32, #tpu.memory_space<vmem>>, %arg6: memref<16x18xf32, #tpu.memory_space<vmem>>, %arg7: memref<16x1xf32, #tpu.memory_space<vmem>>, %arg8: memref<16x144xf32, #tpu.memory_space<vmem>>, %arg9: memref<16x1xf32, #tpu.memory_space<vmem>>, %arg10: memref<2x144xf32, #tpu.memory_space<vmem>>, %arg11: memref<2x1xf32, #tpu.memory_space<vmem>>, %arg12: memref<2x256xf32, #tpu.memory_space<vmem>>) attributes {dimension_semantics = [], scalar_prefetch = 0 : i64, scratch_operands = 0 : i64, tpu.core_type = #tpu.core_type<tc>} {
    %c0 = arith.constant 0 : index
    %0 = memref.load %arg0[%c0] : memref<2xf32, #tpu.memory_space<smem>>
    %c1 = arith.constant 1 : index
    %1 = memref.load %arg0[%c1] : memref<2xf32, #tpu.memory_space<smem>>
    %c0_0 = arith.constant 0 : index
    %c0_1 = arith.constant 0 : index
    %2 = vector.load %arg1[%c0_0, %c0_1] : memref<2x256xf32, #tpu.memory_space<vmem>>, vector<2x256xf32>
    %c0_2 = arith.constant 0 : index
    %c0_3 = arith.constant 0 : index
    %3 = vector.load %arg3[%c0_2, %c0_3] : memref<256x128xf32, #tpu.memory_space<vmem>>, vector<256x128xf32>
    %cst = arith.constant dense<0.000000e+00> : vector<2x128xf32>
    %4 = tpu.matmul %2, %3, %cst {dimension_numbers = #tpu.dot_dimension_numbers<[1], [0], [0], [1], [0, 0, 1, 1], [], []>} : vector<2x256xf32>, vector<256x128xf32>, vector<2x128xf32> -> vector<2x128xf32>
    %c0_4 = arith.constant 0 : index
    %c0_5 = arith.constant 0 : index
    %5 = vector.load %arg2[%c0_4, %c0_5] : memref<2x128xf32, #tpu.memory_space<vmem>>, vector<2x128xf32>
    %6 = arith.subf %5, %4 : vector<2x128xf32>
    %c0_6 = arith.constant 0 : index
    %c0_7 = arith.constant 0 : index
    %7 = vector.load %arg4[%c0_6, %c0_7] : memref<128x256xf32, #tpu.memory_space<vmem>>, vector<128x256xf32>
    %cst_8 = arith.constant dense<0.000000e+00> : vector<2x256xf32>
    %8 = tpu.matmul %6, %7, %cst_8 {dimension_numbers = #tpu.dot_dimension_numbers<[1], [0], [0], [1], [0, 0, 1, 1], [], []>} : vector<2x128xf32>, vector<128x256xf32>, vector<2x256xf32> -> vector<2x256xf32>
    %9 = arith.mulf %0, %1 : f32
    %10 = vector.broadcast %9 : f32 to vector<2x256xf32>
    %11 = arith.mulf %10, %8 : vector<2x256xf32>
    %12 = arith.addf %11, %2 : vector<2x256xf32>
    %c0_9 = arith.constant 0 : index
    %c0_10 = arith.constant 0 : index
    %13 = vector.load %arg5[%c0_9, %c0_10] : memref<9x256xf32, #tpu.memory_space<vmem>>, vector<9x256xf32>
    %c0_11 = arith.constant 0 : index
    %c0_12 = arith.constant 0 : index
    %14 = vector.load %arg6[%c0_11, %c0_12] : memref<16x18xf32, #tpu.memory_space<vmem>>, vector<16x18xf32>
    %c17_i32 = arith.constant 17 : i32
    %15 = tpu.dynamic_rotate %2 by %c17_i32 dim 1 : vector<2x256xf32>, i32 -> vector<2x256xf32>
    %16 = vector.extract_strided_slice %13 {offsets = [0, 0], sizes = [1, 256], strides = [1, 1]} : vector<9x256xf32> to vector<1x256xf32>
    %17 = vector.broadcast %16 : vector<1x256xf32> to vector<2x256xf32>
    %18 = arith.mulf %15, %17 : vector<2x256xf32>
    %c16_i32 = arith.constant 16 : i32
    %19 = tpu.dynamic_rotate %2 by %c16_i32 dim 1 : vector<2x256xf32>, i32 -> vector<2x256xf32>
    %20 = vector.extract_strided_slice %13 {offsets = [1, 0], sizes = [1, 256], strides = [1, 1]} : vector<9x256xf32> to vector<1x256xf32>
    %21 = vector.broadcast %20 : vector<1x256xf32> to vector<2x256xf32>
    %22 = arith.mulf %19, %21 : vector<2x256xf32>
    %c15_i32 = arith.constant 15 : i32
    %23 = tpu.dynamic_rotate %2 by %c15_i32 dim 1 : vector<2x256xf32>, i32 -> vector<2x256xf32>
    %24 = vector.extract_strided_slice %13 {offsets = [2, 0], sizes = [1, 256], strides = [1, 1]} : vector<9x256xf32> to vector<1x256xf32>
    %25 = vector.broadcast %24 : vector<1x256xf32> to vector<2x256xf32>
    %26 = arith.mulf %23, %25 : vector<2x256xf32>
    %c1_i32 = arith.constant 1 : i32
    %27 = tpu.dynamic_rotate %2 by %c1_i32 dim 1 : vector<2x256xf32>, i32 -> vector<2x256xf32>
    %28 = vector.extract_strided_slice %13 {offsets = [3, 0], sizes = [1, 256], strides = [1, 1]} : vector<9x256xf32> to vector<1x256xf32>
    %29 = vector.broadcast %28 : vector<1x256xf32> to vector<2x256xf32>
    %30 = arith.mulf %27, %29 : vector<2x256xf32>
    %31 = vector.extract_strided_slice %13 {offsets = [4, 0], sizes = [1, 256], strides = [1, 1]} : vector<9x256xf32> to vector<1x256xf32>
    %32 = vector.broadcast %31 : vector<1x256xf32> to vector<2x256xf32>
    %33 = arith.mulf %2, %32 : vector<2x256xf32>
    %c255_i32 = arith.constant 255 : i32
    %34 = tpu.dynamic_rotate %2 by %c255_i32 dim 1 : vector<2x256xf32>, i32 -> vector<2x256xf32>
    %35 = vector.extract_strided_slice %13 {offsets = [5, 0], sizes = [1, 256], strides = [1, 1]} : vector<9x256xf32> to vector<1x256xf32>
    %36 = vector.broadcast %35 : vector<1x256xf32> to vector<2x256xf32>
    %37 = arith.mulf %34, %36 : vector<2x256xf32>
    %c241_i32 = arith.constant 241 : i32
    %38 = tpu.dynamic_rotate %2 by %c241_i32 dim 1 : vector<2x256xf32>, i32 -> vector<2x256xf32>
    %39 = vector.extract_strided_slice %13 {offsets = [6, 0], sizes = [1, 256], strides = [1, 1]} : vector<9x256xf32> to vector<1x256xf32>
    %40 = vector.broadcast %39 : vector<1x256xf32> to vector<2x256xf32>
    %41 = arith.mulf %38, %40 : vector<2x256xf32>
    %c240_i32 = arith.constant 240 : i32
    %42 = tpu.dynamic_rotate %2 by %c240_i32 dim 1 : vector<2x256xf32>, i32 -> vector<2x256xf32>
    %43 = vector.extract_strided_slice %13 {offsets = [7, 0], sizes = [1, 256], strides = [1, 1]} : vector<9x256xf32> to vector<1x256xf32>
    %44 = vector.broadcast %43 : vector<1x256xf32> to vector<2x256xf32>
    %45 = arith.mulf %42, %44 : vector<2x256xf32>
    %c239_i32 = arith.constant 239 : i32
    %46 = tpu.dynamic_rotate %2 by %c239_i32 dim 1 : vector<2x256xf32>, i32 -> vector<2x256xf32>
    %47 = vector.extract_strided_slice %13 {offsets = [8, 0], sizes = [1, 256], strides = [1, 1]} : vector<9x256xf32> to vector<1x256xf32>
    %48 = vector.broadcast %47 : vector<1x256xf32> to vector<2x256xf32>
    %49 = arith.mulf %46, %48 : vector<2x256xf32>
    %50 = tpu.concatenate %18, %22, %26, %30, %33, %37, %41, %45, %49 in 0 : vector<2x256xf32>, vector<2x256xf32>, vector<2x256xf32>, vector<2x256xf32>, vector<2x256xf32>, vector<2x256xf32>, vector<2x256xf32>, vector<2x256xf32>, vector<2x256xf32> -> vector<18x256xf32>
    %cst_13 = arith.constant dense<0.000000e+00> : vector<16x256xf32>
    %51 = tpu.matmul %14, %50, %cst_13 {dimension_numbers = #tpu.dot_dimension_numbers<[1], [0], [0], [1], [0, 0, 1, 1], [], []>} : vector<16x18xf32>, vector<18x256xf32>, vector<16x256xf32> -> vector<16x256xf32>
    %c0_14 = arith.constant 0 : index
    %c0_15 = arith.constant 0 : index
    %52 = vector.load %arg7[%c0_14, %c0_15] : memref<16x1xf32, #tpu.memory_space<vmem>>, vector<16x1xf32>
    %53 = vector.broadcast %52 : vector<16x1xf32> to vector<16x256xf32>
    %54 = arith.addf %51, %53 : vector<16x256xf32>
    %cst_16 = arith.constant 0.000000e+00 : f32
    %55 = vector.broadcast %cst_16 : f32 to vector<16x256xf32>
    %56 = arith.maximumf %54, %55 : vector<16x256xf32>
    %c0_17 = arith.constant 0 : index
    %c0_18 = arith.constant 0 : index
    %57 = vector.load %arg8[%c0_17, %c0_18] : memref<16x144xf32, #tpu.memory_space<vmem>>, vector<16x144xf32>
    %c17_i32_19 = arith.constant 17 : i32
    %58 = tpu.dynamic_rotate %56 by %c17_i32_19 dim 1 : vector<16x256xf32>, i32 -> vector<16x256xf32>
    %59 = vector.extract_strided_slice %13 {offsets = [0, 0], sizes = [1, 256], strides = [1, 1]} : vector<9x256xf32> to vector<1x256xf32>
    %60 = vector.broadcast %59 : vector<1x256xf32> to vector<16x256xf32>
    %61 = arith.mulf %58, %60 : vector<16x256xf32>
    %c16_i32_20 = arith.constant 16 : i32
    %62 = tpu.dynamic_rotate %56 by %c16_i32_20 dim 1 : vector<16x256xf32>, i32 -> vector<16x256xf32>
    %63 = vector.extract_strided_slice %13 {offsets = [1, 0], sizes = [1, 256], strides = [1, 1]} : vector<9x256xf32> to vector<1x256xf32>
    %64 = vector.broadcast %63 : vector<1x256xf32> to vector<16x256xf32>
    %65 = arith.mulf %62, %64 : vector<16x256xf32>
    %c15_i32_21 = arith.constant 15 : i32
    %66 = tpu.dynamic_rotate %56 by %c15_i32_21 dim 1 : vector<16x256xf32>, i32 -> vector<16x256xf32>
    %67 = vector.extract_strided_slice %13 {offsets = [2, 0], sizes = [1, 256], strides = [1, 1]} : vector<9x256xf32> to vector<1x256xf32>
    %68 = vector.broadcast %67 : vector<1x256xf32> to vector<16x256xf32>
    %69 = arith.mulf %66, %68 : vector<16x256xf32>
    %c1_i32_22 = arith.constant 1 : i32
    %70 = tpu.dynamic_rotate %56 by %c1_i32_22 dim 1 : vector<16x256xf32>, i32 -> vector<16x256xf32>
    %71 = vector.extract_strided_slice %13 {offsets = [3, 0], sizes = [1, 256], strides = [1, 1]} : vector<9x256xf32> to vector<1x256xf32>
    %72 = vector.broadcast %71 : vector<1x256xf32> to vector<16x256xf32>
    %73 = arith.mulf %70, %72 : vector<16x256xf32>
    %74 = vector.extract_strided_slice %13 {offsets = [4, 0], sizes = [1, 256], strides = [1, 1]} : vector<9x256xf32> to vector<1x256xf32>
    %75 = vector.broadcast %74 : vector<1x256xf32> to vector<16x256xf32>
    %76 = arith.mulf %56, %75 : vector<16x256xf32>
    %c255_i32_23 = arith.constant 255 : i32
    %77 = tpu.dynamic_rotate %56 by %c255_i32_23 dim 1 : vector<16x256xf32>, i32 -> vector<16x256xf32>
    %78 = vector.extract_strided_slice %13 {offsets = [5, 0], sizes = [1, 256], strides = [1, 1]} : vector<9x256xf32> to vector<1x256xf32>
    %79 = vector.broadcast %78 : vector<1x256xf32> to vector<16x256xf32>
    %80 = arith.mulf %77, %79 : vector<16x256xf32>
    %c241_i32_24 = arith.constant 241 : i32
    %81 = tpu.dynamic_rotate %56 by %c241_i32_24 dim 1 : vector<16x256xf32>, i32 -> vector<16x256xf32>
    %82 = vector.extract_strided_slice %13 {offsets = [6, 0], sizes = [1, 256], strides = [1, 1]} : vector<9x256xf32> to vector<1x256xf32>
    %83 = vector.broadcast %82 : vector<1x256xf32> to vector<16x256xf32>
    %84 = arith.mulf %81, %83 : vector<16x256xf32>
    %c240_i32_25 = arith.constant 240 : i32
    %85 = tpu.dynamic_rotate %56 by %c240_i32_25 dim 1 : vector<16x256xf32>, i32 -> vector<16x256xf32>
    %86 = vector.extract_strided_slice %13 {offsets = [7, 0], sizes = [1, 256], strides = [1, 1]} : vector<9x256xf32> to vector<1x256xf32>
    %87 = vector.broadcast %86 : vector<1x256xf32> to vector<16x256xf32>
    %88 = arith.mulf %85, %87 : vector<16x256xf32>
    %c239_i32_26 = arith.constant 239 : i32
    %89 = tpu.dynamic_rotate %56 by %c239_i32_26 dim 1 : vector<16x256xf32>, i32 -> vector<16x256xf32>
    %90 = vector.extract_strided_slice %13 {offsets = [8, 0], sizes = [1, 256], strides = [1, 1]} : vector<9x256xf32> to vector<1x256xf32>
    %91 = vector.broadcast %90 : vector<1x256xf32> to vector<16x256xf32>
    %92 = arith.mulf %89, %91 : vector<16x256xf32>
    %93 = tpu.concatenate %61, %65, %69, %73, %76, %80, %84, %88, %92 in 0 : vector<16x256xf32>, vector<16x256xf32>, vector<16x256xf32>, vector<16x256xf32>, vector<16x256xf32>, vector<16x256xf32>, vector<16x256xf32>, vector<16x256xf32>, vector<16x256xf32> -> vector<144x256xf32>
    %cst_27 = arith.constant dense<0.000000e+00> : vector<16x256xf32>
    %94 = tpu.matmul %57, %93, %cst_27 {dimension_numbers = #tpu.dot_dimension_numbers<[1], [0], [0], [1], [0, 0, 1, 1], [], []>} : vector<16x144xf32>, vector<144x256xf32>, vector<16x256xf32> -> vector<16x256xf32>
    %c0_28 = arith.constant 0 : index
    %c0_29 = arith.constant 0 : index
    %95 = vector.load %arg9[%c0_28, %c0_29] : memref<16x1xf32, #tpu.memory_space<vmem>>, vector<16x1xf32>
    %96 = vector.broadcast %95 : vector<16x1xf32> to vector<16x256xf32>
    %97 = arith.addf %94, %96 : vector<16x256xf32>
    %cst_30 = arith.constant 0.000000e+00 : f32
    %98 = vector.broadcast %cst_30 : f32 to vector<16x256xf32>
    %99 = arith.maximumf %97, %98 : vector<16x256xf32>
    %c0_31 = arith.constant 0 : index
    %c0_32 = arith.constant 0 : index
    %100 = vector.load %arg10[%c0_31, %c0_32] : memref<2x144xf32, #tpu.memory_space<vmem>>, vector<2x144xf32>
    %c17_i32_33 = arith.constant 17 : i32
    %101 = tpu.dynamic_rotate %99 by %c17_i32_33 dim 1 : vector<16x256xf32>, i32 -> vector<16x256xf32>
    %102 = vector.extract_strided_slice %13 {offsets = [0, 0], sizes = [1, 256], strides = [1, 1]} : vector<9x256xf32> to vector<1x256xf32>
    %103 = vector.broadcast %102 : vector<1x256xf32> to vector<16x256xf32>
    %104 = arith.mulf %101, %103 : vector<16x256xf32>
    %c16_i32_34 = arith.constant 16 : i32
    %105 = tpu.dynamic_rotate %99 by %c16_i32_34 dim 1 : vector<16x256xf32>, i32 -> vector<16x256xf32>
    %106 = vector.extract_strided_slice %13 {offsets = [1, 0], sizes = [1, 256], strides = [1, 1]} : vector<9x256xf32> to vector<1x256xf32>
    %107 = vector.broadcast %106 : vector<1x256xf32> to vector<16x256xf32>
    %108 = arith.mulf %105, %107 : vector<16x256xf32>
    %c15_i32_35 = arith.constant 15 : i32
    %109 = tpu.dynamic_rotate %99 by %c15_i32_35 dim 1 : vector<16x256xf32>, i32 -> vector<16x256xf32>
    %110 = vector.extract_strided_slice %13 {offsets = [2, 0], sizes = [1, 256], strides = [1, 1]} : vector<9x256xf32> to vector<1x256xf32>
    %111 = vector.broadcast %110 : vector<1x256xf32> to vector<16x256xf32>
    %112 = arith.mulf %109, %111 : vector<16x256xf32>
    %c1_i32_36 = arith.constant 1 : i32
    %113 = tpu.dynamic_rotate %99 by %c1_i32_36 dim 1 : vector<16x256xf32>, i32 -> vector<16x256xf32>
    %114 = vector.extract_strided_slice %13 {offsets = [3, 0], sizes = [1, 256], strides = [1, 1]} : vector<9x256xf32> to vector<1x256xf32>
    %115 = vector.broadcast %114 : vector<1x256xf32> to vector<16x256xf32>
    %116 = arith.mulf %113, %115 : vector<16x256xf32>
    %117 = vector.extract_strided_slice %13 {offsets = [4, 0], sizes = [1, 256], strides = [1, 1]} : vector<9x256xf32> to vector<1x256xf32>
    %118 = vector.broadcast %117 : vector<1x256xf32> to vector<16x256xf32>
    %119 = arith.mulf %99, %118 : vector<16x256xf32>
    %c255_i32_37 = arith.constant 255 : i32
    %120 = tpu.dynamic_rotate %99 by %c255_i32_37 dim 1 : vector<16x256xf32>, i32 -> vector<16x256xf32>
    %121 = vector.extract_strided_slice %13 {offsets = [5, 0], sizes = [1, 256], strides = [1, 1]} : vector<9x256xf32> to vector<1x256xf32>
    %122 = vector.broadcast %121 : vector<1x256xf32> to vector<16x256xf32>
    %123 = arith.mulf %120, %122 : vector<16x256xf32>
    %c241_i32_38 = arith.constant 241 : i32
    %124 = tpu.dynamic_rotate %99 by %c241_i32_38 dim 1 : vector<16x256xf32>, i32 -> vector<16x256xf32>
    %125 = vector.extract_strided_slice %13 {offsets = [6, 0], sizes = [1, 256], strides = [1, 1]} : vector<9x256xf32> to vector<1x256xf32>
    %126 = vector.broadcast %125 : vector<1x256xf32> to vector<16x256xf32>
    %127 = arith.mulf %124, %126 : vector<16x256xf32>
    %c240_i32_39 = arith.constant 240 : i32
    %128 = tpu.dynamic_rotate %99 by %c240_i32_39 dim 1 : vector<16x256xf32>, i32 -> vector<16x256xf32>
    %129 = vector.extract_strided_slice %13 {offsets = [7, 0], sizes = [1, 256], strides = [1, 1]} : vector<9x256xf32> to vector<1x256xf32>
    %130 = vector.broadcast %129 : vector<1x256xf32> to vector<16x256xf32>
    %131 = arith.mulf %128, %130 : vector<16x256xf32>
    %c239_i32_40 = arith.constant 239 : i32
    %132 = tpu.dynamic_rotate %99 by %c239_i32_40 dim 1 : vector<16x256xf32>, i32 -> vector<16x256xf32>
    %133 = vector.extract_strided_slice %13 {offsets = [8, 0], sizes = [1, 256], strides = [1, 1]} : vector<9x256xf32> to vector<1x256xf32>
    %134 = vector.broadcast %133 : vector<1x256xf32> to vector<16x256xf32>
    %135 = arith.mulf %132, %134 : vector<16x256xf32>
    %136 = tpu.concatenate %104, %108, %112, %116, %119, %123, %127, %131, %135 in 0 : vector<16x256xf32>, vector<16x256xf32>, vector<16x256xf32>, vector<16x256xf32>, vector<16x256xf32>, vector<16x256xf32>, vector<16x256xf32>, vector<16x256xf32>, vector<16x256xf32> -> vector<144x256xf32>
    %cst_41 = arith.constant dense<0.000000e+00> : vector<2x256xf32>
    %137 = tpu.matmul %100, %136, %cst_41 {dimension_numbers = #tpu.dot_dimension_numbers<[1], [0], [0], [1], [0, 0, 1, 1], [], []>} : vector<2x144xf32>, vector<144x256xf32>, vector<2x256xf32> -> vector<2x256xf32>
    %c0_42 = arith.constant 0 : index
    %c0_43 = arith.constant 0 : index
    %138 = vector.load %arg11[%c0_42, %c0_43] : memref<2x1xf32, #tpu.memory_space<vmem>>, vector<2x1xf32>
    %139 = vector.broadcast %138 : vector<2x1xf32> to vector<2x256xf32>
    %140 = arith.addf %137, %139 : vector<2x256xf32>
    %141 = arith.addf %12, %140 : vector<2x256xf32>
    %cst_44 = arith.constant 0.000000e+00 : f32
    %142 = vector.broadcast %cst_44 : f32 to vector<2x256xf32>
    %143 = arith.maximumf %141, %142 : vector<2x256xf32>
    %c0_45 = arith.constant 0 : index
    %c0_46 = arith.constant 0 : index
    %144 = vector.load %arg12[%c0_45, %c0_46] : memref<2x256xf32, #tpu.memory_space<vmem>>, vector<2x256xf32>
    tpu.vector_store %arg12[%c0_45, %c0_46], %143 {strides = array<i32>} : memref<2x256xf32, #tpu.memory_space<vmem>>, vector<2x256xf32>,
    return
  }
}

</mosaic_0001>

<llo_original>
// kernel: tpu_custom_call.1
$region0: #{tpu_custom_call.1}
  #allocation0 [shape = 'u32[]', space=smem, size = 0x4, offset = 0x4, fixed_abs, tag = 'smem constant byte address 0x4 - core index']
  #allocation1 [shape = 'u32[144,128]{1,0:T(1,128)}', space=vmem, size = 0x12000, scoped, tag = 'internal scratch']
  %s0 = inlined_call_operand.hbm [shape: f32[2], index: 0, kind: input, shape index: {}]
  %s1 = inlined_call_operand.hbm [shape: f32[2,256], index: 1, kind: input, shape index: {}]
  %s2 = inlined_call_operand.hbm [shape: f32[2,128], index: 2, kind: input, shape index: {}]
  %s3 = inlined_call_operand.hbm [shape: f32[256,128], index: 3, kind: input, shape index: {}]
  %s4 = inlined_call_operand.hbm [shape: f32[128,256], index: 4, kind: input, shape index: {}]
  %s5 = inlined_call_operand.vmem [shape: f32[9,256], index: 5, kind: input, shape index: {}]
  %s6 = inlined_call_operand.hbm [shape: f32[16,18], index: 6, kind: input, shape index: {}]
  %s7 = inlined_call_operand.vmem [shape: f32[16,1], index: 7, kind: input, shape index: {}]
  %s8 = inlined_call_operand.vmem [shape: f32[16,144], index: 8, kind: input, shape index: {}]
  %s9 = inlined_call_operand.vmem [shape: f32[16,1], index: 9, kind: input, shape index: {}]
  %s10 = inlined_call_operand.vmem [shape: f32[2,144], index: 10, kind: input, shape index: {}]
  %s11 = inlined_call_operand.vmem [shape: f32[2,1], index: 11, kind: input, shape index: {}]
  %s12 = inlined_call_operand.hbm [shape: f32[2,256], index: 12, kind: output, shape index: {}]
  %s13 = sld [smem:[#allocation0]]
  $region82: #{tpu_custom_call.1} parent=0
    _
  %s15 = ssub.s32 1, %s13
  %s16 = scalar_select 0, %s15, %s13
  $region1: #{tpu_custom_call.1} parent=0
    #allocation2 [shape = 'u8[512]{0}', space=smem, size = 0x200, scoped, tag = 'input window, operand 0, single buffered']
    #allocation3 [shape = 's32[1]{0}', space=sflag, size = 0x4, scoped, tag = 'scoped memory for tpu_custom_call.1']
    #allocation4 [shape = 's32[1]{0}', space=sflag, size = 0x4, scoped, tag = 'scoped memory for tpu_custom_call.1']
    #allocation5 [shape = 's32[1]{0}', space=sflag, size = 0x4, scoped, tag = 'scoped memory for tpu_custom_call.1']
    #allocation6 [shape = 'u8[2048]{0}', space=vmem, size = 0x800, scoped, tag = 'input window, operand 1, single buffered']
    #allocation7 [shape = 'u8[1024]{0}', space=vmem, size = 0x400, scoped, tag = 'input window, operand 2, single buffered']
    #allocation8 [shape = 's32[1]{0}', space=sflag, size = 0x4, scoped, tag = 'scoped memory for tpu_custom_call.1']
    #allocation9 [shape = 'u8[131072]{0}', space=vmem, size = 0x20000, scoped, tag = 'input window, operand 3, single buffered']
    #allocation10 [shape = 'u8[131072]{0}', space=vmem, size = 0x20000, scoped, tag = 'input window, operand 4, single buffered']
    #allocation11 [shape = 's32[1]{0}', space=sflag, size = 0x4, scoped, tag = 'scoped memory for tpu_custom_call.1']
    #allocation12 [shape = 'u8[8192]{0}', space=vmem, size = 0x2000, scoped, tag = 'input window, operand 6, single buffered']
    #allocation13 [shape = 'u8[2048]{0}', space=vmem, size = 0x800, scoped, tag = 'output window, operand 0, single buffered']
    %17 = vsyncpa [#allocation5], 0
    %18 = vsyncpa [#allocation3], 0
    %19 = vsyncpa [#allocation8], 0
    %20 = vsyncpa [#allocation11], 0
    %21 = vsyncpa [#allocation4], 0
    // Predicated region
    $region2: #{tpu_custom_call.1} parent=1 // pred_check
      _
    $region3: #{tpu_custom_call.1} parent=1 // pred_check_branch
      %23 = sbr.rel (0) target = $region5
    $region4: #{tpu_custom_call.1} parent=1 // pred_region
      %s25 = ssub.s32 16, 16
      %26 = vsyncadd [#allocation5], %s25
      %29 = dma.hbm_to_smem %s0, 16, [#allocation2], [#allocation5]
    $region5: #{tpu_custom_call.1} parent=1 // pred_fallthru
      _
    // Predicated region
    $region6: #{tpu_custom_call.1} parent=1 // pred_check
      _
    $region7: #{tpu_custom_call.1} parent=1 // pred_check_branch
      %31 = sbr.rel (0) target = $region9
    $region8: #{tpu_custom_call.1} parent=1 // pred_region
      %s33 = ssub.s32 64, 64
      %34 = vsyncadd [#allocation3], %s33
      %s36 = sshll.u32 [#allocation6], 4
      %s37 = int_to_ptr.vmem [resolvable:$true] %s36
      %39 = dma.hbm_to_vmem [thread:$0]  %s1, 64, %s37, [#allocation3]
    $region9: #{tpu_custom_call.1} parent=1 // pred_fallthru
      _
    // Predicated region
    $region10: #{tpu_custom_call.1} parent=1 // pred_check
      _
    $region11: #{tpu_custom_call.1} parent=1 // pred_check_branch
      %41 = sbr.rel (0) target = $region13
    $region12: #{tpu_custom_call.1} parent=1 // pred_region
      %s43 = ssub.s32 32, 32
      %44 = vsyncadd [#allocation8], %s43
      %s46 = sshll.u32 [#allocation7], 4
      %s47 = int_to_ptr.vmem [resolvable:$true] %s46
      %49 = dma.hbm_to_vmem [thread:$0]  %s2, 32, %s47, [#allocation8]
    $region13: #{tpu_custom_call.1} parent=1 // pred_fallthru
      _
    // Predicated region
    $region14: #{tpu_custom_call.1} parent=1 // pred_check
      _
    $region15: #{tpu_custom_call.1} parent=1 // pred_check_branch
      %51 = sbr.rel (0) target = $region17
    $region16: #{tpu_custom_call.1} parent=1 // pred_region
      %s53 = ssub.s32 4096, 4096
      %54 = vsyncadd [#allocation8], %s53
      %s55 = sshll.u32 [#allocation9], 4
      %s56 = int_to_ptr.vmem [resolvable:$true] %s55
      %61 = dma.hbm_to_vmem [thread:$0]  %s3, 4096, %s56, [#allocation8], 128, 128, 8
    $region17: #{tpu_custom_call.1} parent=1 // pred_fallthru
      _
    // Predicated region
    $region18: #{tpu_custom_call.1} parent=1 // pred_check
      _
    $region19: #{tpu_custom_call.1} parent=1 // pred_check_branch
      %63 = sbr.rel (0) target = $region21
    $region20: #{tpu_custom_call.1} parent=1 // pred_region
      %s65 = ssub.s32 4096, 4096
      %66 = vsyncadd [#allocation11], %s65
      %s67 = sshll.u32 [#allocation10], 4
      %s68 = int_to_ptr.vmem [resolvable:$true] %s67
      %73 = dma.hbm_to_vmem [thread:$0]  %s4, 4096, %s68, [#allocation11], 256, 256, 16
    $region21: #{tpu_custom_call.1} parent=1 // pred_fallthru
      _
    // Predicated region
    $region22: #{tpu_custom_call.1} parent=1 // pred_check
      _
    $region23: #{tpu_custom_call.1} parent=1 // pred_check_branch
      %75 = sbr.rel (0) target = $region25
    $region24: #{tpu_custom_call.1} parent=1 // pred_region
      _
    $region25: #{tpu_custom_call.1} parent=1 // pred_fallthru
      _
    // Predicated region
    $region26: #{tpu_custom_call.1} parent=1 // pred_check
      _
    $region27: #{tpu_custom_call.1} parent=1 // pred_check_branch
      %77 = sbr.rel (0) target = $region29
    $region28: #{tpu_custom_call.1} parent=1 // pred_region
      %s79 = ssub.s32 256, 256
      %80 = vsyncadd [#allocation11], %s79
      %s81 = sshll.u32 [#allocation12], 4
      %s82 = int_to_ptr.vmem [resolvable:$true] %s81
      %87 = dma.hbm_to_vmem [thread:$0]  %s6, 256, %s82, [#allocation11], 128, 128, 8
    $region29: #{tpu_custom_call.1} parent=1 // pred_fallthru
      _
    // Predicated region
    $region30: #{tpu_custom_call.1} parent=1 // pred_check
      _
    $region31: #{tpu_custom_call.1} parent=1 // pred_check_branch
      %89 = sbr.rel (0) target = $region33
    $region32: #{tpu_custom_call.1} parent=1 // pred_region
      _
    $region33: #{tpu_custom_call.1} parent=1 // pred_fallthru
      _
    // Predicated region
    $region34: #{tpu_custom_call.1} parent=1 // pred_check
      _
    $region35: #{tpu_custom_call.1} parent=1 // pred_check_branch
      %91 = sbr.rel (0) target = $region37
    $region36: #{tpu_custom_call.1} parent=1 // pred_region
      _
    $region37: #{tpu_custom_call.1} parent=1 // pred_fallthru
      _
    // Predicated region
    $region38: #{tpu_custom_call.1} parent=1 // pred_check
      _
    $region39: #{tpu_custom_call.1} parent=1 // pred_check_branch
      %93 = sbr.rel (0) target = $region41
    $region40: #{tpu_custom_call.1} parent=1 // pred_region
      _
    $region41: #{tpu_custom_call.1} parent=1 // pred_fallthru
      _
    // Predicated region
    $region42: #{tpu_custom_call.1} parent=1 // pred_check
      _
    $region43: #{tpu_custom_call.1} parent=1 // pred_check_branch
      %95 = sbr.rel (0) target = $region45
    $region44: #{tpu_custom_call.1} parent=1 // pred_region
      _
    $region45: #{tpu_custom_call.1} parent=1 // pred_fallthru
      _
    // Predicated region
    $region46: #{tpu_custom_call.1} parent=1 // pred_check
      _
    $region47: #{tpu_custom_call.1} parent=1 // pred_check_branch
      %97 = sbr.rel (0) target = $region49
    $region48: #{tpu_custom_call.1} parent=1 // pred_region
      _
    $region49: #{tpu_custom_call.1} parent=1 // pred_fallthru
      _
    // Predicated region
    $region50: #{tpu_custom_call.1} parent=1 // pred_check
      _
    $region51: #{tpu_custom_call.1} parent=1 // pred_check_branch
      %99 = sbr.rel (0) target = $region53
    $region52: #{tpu_custom_call.1} parent=1 // pred_region
      %100 = dma.done [#allocation5], 16
    $region53: #{tpu_custom_call.1} parent=1 // pred_fallthru
      _
    // Predicated region
    $region54: #{tpu_custom_call.1} parent=1 // pred_check
      _
    $region55: #{tpu_custom_call.1} parent=1 // pred_check_branch
      %102 = sbr.rel (0) target = $region57
    $region56: #{tpu_custom_call.1} parent=1 // pred_region
      %103 = dma.done [#allocation3], 64
    $region57: #{tpu_custom_call.1} parent=1 // pred_fallthru
      _
    // Predicated region
    $region58: #{tpu_custom_call.1} parent=1 // pred_check
      _
    $region59: #{tpu_custom_call.1} parent=1 // pred_check_branch
      %105 = sbr.rel (0) target = $region61
    $region60: #{tpu_custom_call.1} parent=1 // pred_region
      %106 = dma.done [#allocation8], 32
    $region61: #{tpu_custom_call.1} parent=1 // pred_fallthru
      _
    // Predicated region
    $region62: #{tpu_custom_call.1} parent=1 // pred_check
      _
    $region63: #{tpu_custom_call.1} parent=1 // pred_check_branch
      %108 = sbr.rel (0) target = $region65
    $region64: #{tpu_custom_call.1} parent=1 // pred_region
      %109 = dma.done [#allocation8], 4096
    $region65: #{tpu_custom_call.1} parent=1 // pred_fallthru
      _
    // Predicated region
    $region66: #{tpu_custom_call.1} parent=1 // pred_check
      _
    $region67: #{tpu_custom_call.1} parent=1 // pred_check_branch
      %111 = sbr.rel (0) target = $region69
    $region68: #{tpu_custom_call.1} parent=1 // pred_region
      %112 = dma.done [#allocation11], 4096
    $region69: #{tpu_custom_call.1} parent=1 // pred_fallthru
      _
    // Predicated region
    $region70: #{tpu_custom_call.1} parent=1 // pred_check
      _
    $region71: #{tpu_custom_call.1} parent=1 // pred_check_branch
      %114 = sbr.rel (0) target = $region73
    $region72: #{tpu_custom_call.1} parent=1 // pred_region
      %115 = dma.done [#allocation11], 256
    $region73: #{tpu_custom_call.1} parent=1 // pred_fallthru
      _
    %116 = sfence
    %s117 = sld [smem:[#allocation2]]
    %s118 = sld [smem:[#allocation2 + $0x1]]
    %v119 = vld [vmem:[#allocation6] sm:$0xf]
    %v120 = vld [vmem:[#allocation9] sm:$0xff]
    %v121 = vld [vmem:[#allocation9 + $0x8] sm:$0xff]
    %v122 = vld [vmem:[#allocation9 + $0x10] sm:$0xff]
    %v123 = vld [vmem:[#allocation9 + $0x18] sm:$0xff]
    %v124 = vld [vmem:[#allocation9 + $0x20] sm:$0xff]
    %v125 = vld [vmem:[#allocation9 + $0x28] sm:$0xff]
    %v126 = vld [vmem:[#allocation9 + $0x30] sm:$0xff]
    %v127 = vld [vmem:[#allocation9 + $0x38] sm:$0xff]
    %v128 = vld [vmem:[#allocation9 + $0x40] sm:$0xff]
    %v129 = vld [vmem:[#allocation9 + $0x48] sm:$0xff]
    %v130 = vld [vmem:[#allocation9 + $0x50] sm:$0xff]
    %v131 = vld [vmem:[#allocation9 + $0x58] sm:$0xff]
    %v132 = vld [vmem:[#allocation9 + $0x60] sm:$0xff]
    %v133 = vld [vmem:[#allocation9 + $0x68] sm:$0xff]
    %v134 = vld [vmem:[#allocation9 + $0x70] sm:$0xff]
    %v135 = vld [vmem:[#allocation9 + $0x78] sm:$0xff]
    %v136 = vld [vmem:[#allocation9 + $0x80] sm:$0xff]
    %v137 = vld [vmem:[#allocation9 + $0x88] sm:$0xff]
    %v138 = vld [vmem:[#allocation9 + $0x90] sm:$0xff]
    %v139 = vld [vmem:[#allocation9 + $0x98] sm:$0xff]
    %v140 = vld [vmem:[#allocation9 + $0xa0] sm:$0xff]
    %v141 = vld [vmem:[#allocation9 + $0xa8] sm:$0xff]
    %v142 = vld [vmem:[#allocation9 + $0xb0] sm:$0xff]
    %v143 = vld [vmem:[#allocation9 + $0xb8] sm:$0xff]
    %v144 = vld [vmem:[#allocation9 + $0xc0] sm:$0xff]
    %v145 = vld [vmem:[#allocation9 + $0xc8] sm:$0xff]
    %v146 = vld [vmem:[#allocation9 + $0xd0] sm:$0xff]
    %v147 = vld [vmem:[#allocation9 + $0xd8] sm:$0xff]
    %v148 = vld [vmem:[#allocation9 + $0xe0] sm:$0xff]
    %v149 = vld [vmem:[#allocation9 + $0xe8] sm:$0xff]
    %v150 = vld [vmem:[#allocation9 + $0xf0] sm:$0xff]
    %v151 = vld [vmem:[#allocation9 + $0xf8] sm:$0xff]
    %v154 = vunpack.c.l.s4 1983009808
    %v155 = vunpack.c.0.s8 %v154
    %v156 = vlaneseq
    %v157 = vshrl.u32 %v156, 7
    %v158 = vsub.s32 %v155, %v157
    %v159 = vrot.slane %v119, %v158
    %v160 = vcombine.high %v159, %v159
    %163 = vmatprep.subr.mxu0 0.0
    %164 = vmatpush1.msra.mxu0 %v120
    %165 = vmatprep.subr.mxu0 0.0
    %166 = vmatpush1.msra.mxu0 %v121
    %167 = vmatprep.subr.mxu0 0.0
    %168 = vmatpush1.msra.mxu0 %v122
    %169 = vmatprep.subr.mxu0 0.0
    %170 = vmatpush1.msra.mxu0 %v123
    %171 = vmatprep.subr.mxu0 0.0
    %172 = vmatpush1.msra.mxu0 %v124
    %173 = vmatprep.subr.mxu0 0.0
    %174 = vmatpush1.msra.mxu0 %v125
    %175 = vmatprep.subr.mxu0 0.0
    %176 = vmatpush1.msra.mxu0 %v126
    %177 = vmatprep.subr.mxu0 0.0
    %178 = vmatpush1.msra.mxu0 %v127
    %179 = vmatprep.subr.mxu0 0.0
    %180 = vmatpush1.msra.mxu0 %v128
    %181 = vmatprep.subr.mxu0 0.0
    %182 = vmatpush1.msra.mxu0 %v129
    %183 = vmatprep.subr.mxu0 0.0
    %184 = vmatpush1.msra.mxu0 %v130
    %185 = vmatprep.subr.mxu0 0.0
    %186 = vmatpush1.msra.mxu0 %v131
    %187 = vmatprep.subr.mxu0 0.0
    %188 = vmatpush1.msra.mxu0 %v132
    %189 = vmatprep.subr.mxu0 0.0
    %190 = vmatpush1.msra.mxu0 %v133
    %191 = vmatprep.subr.mxu0 0.0
    %192 = vmatpush1.msra.mxu0 %v134
    %193 = vmatprep.subr.mxu0 0.0
    %194 = vmatpush1.msra.mxu0 %v135
    %195 = vmatprep.subr.mxu0 0.0
    %196 = vmatpush1.msra.mxu0 %v136
    %197 = vmatprep.subr.mxu0 0.0
    %198 = vmatpush1.msra.mxu0 %v137
    %199 = vmatprep.subr.mxu0 0.0
    %200 = vmatpush1.msra.mxu0 %v138
    %201 = vmatprep.subr.mxu0 0.0
    %202 = vmatpush1.msra.mxu0 %v139
    %203 = vmatprep.subr.mxu0 0.0
    %204 = vmatpush1.msra.mxu0 %v140
    %205 = vmatprep.subr.mxu0 0.0
    %206 = vmatpush1.msra.mxu0 %v141
    %207 = vmatprep.subr.mxu0 0.0
    %208 = vmatpush1.msra.mxu0 %v142
    %209 = vmatprep.subr.mxu0 0.0
    %210 = vmatpush1.msra.mxu0 %v143
    %211 = vmatprep.subr.mxu0 0.0
    %212 = vmatpush1.msra.mxu0 %v144
    %213 = vmatprep.subr.mxu0 0.0
    %214 = vmatpush1.msra.mxu0 %v145
    %215 = vmatprep.subr.mxu0 0.0
    %216 = vmatpush1.msra.mxu0 %v146
    %217 = vmatprep.subr.mxu0 0.0
    %218 = vmatpush1.msra.mxu0 %v147
    %219 = vmatprep.subr.mxu0 0.0
    %220 = vmatpush1.msra.mxu0 %v148
    %221 = vmatprep.subr.mxu0 0.0
    %222 = vmatpush1.msra.mxu0 %v149
    %223 = vmatprep.subr.mxu0 0.0
    %224 = vmatpush1.msra.mxu0 %v150
    %225 = vmatprep.subr.mxu0 0.0
    %226 = vmatpush1.msra.mxu0 %v151
    %227 = vmatprep.mubr.f32.mxu0 %v160
    %228 = vmatmul.mubr.f32.gmra.mrb[0].mxu0 %v159
    %v229 = vpop.f32.mrb[0].mxu0
    %v230 = vadd.f32 0.0, %v229
    %v231 = vpop.f32.mrb[0].mxu0
    %232 = vdwg.mxu0
    %v233 = vld [vmem:[#allocation7] sm:$0x3]
    %v234 = vsub.f32 %v233, %v230
    %v235 = vld [vmem:[#allocation10] sm:$0xff]
    %v236 = vld [vmem:[#allocation10 + $0x8] sm:$0xff]
    %v237 = vld [vmem:[#allocation10 + $0x10] sm:$0xff]
    %v238 = vld [vmem:[#allocation10 + $0x18] sm:$0xff]
    %v239 = vld [vmem:[#allocation10 + $0x20] sm:$0xff]
    %v240 = vld [vmem:[#allocation10 + $0x28] sm:$0xff]
    %v241 = vld [vmem:[#allocation10 + $0x30] sm:$0xff]
    %v242 = vld [vmem:[#allocation10 + $0x38] sm:$0xff]
    %v243 = vld [vmem:[#allocation10 + $0x40] sm:$0xff]
    %v244 = vld [vmem:[#allocation10 + $0x48] sm:$0xff]
    %v245 = vld [vmem:[#allocation10 + $0x50] sm:$0xff]
    %v246 = vld [vmem:[#allocation10 + $0x58] sm:$0xff]
    %v247 = vld [vmem:[#allocation10 + $0x60] sm:$0xff]
    %v248 = vld [vmem:[#allocation10 + $0x68] sm:$0xff]
    %v249 = vld [vmem:[#allocation10 + $0x70] sm:$0xff]
    %v250 = vld [vmem:[#allocation10 + $0x78] sm:$0xff]
    %v251 = vld [vmem:[#allocation10 + $0x80] sm:$0xff]
    %v252 = vld [vmem:[#allocation10 + $0x88] sm:$0xff]
    %v253 = vld [vmem:[#allocation10 + $0x90] sm:$0xff]
    %v254 = vld [vmem:[#allocation10 + $0x98] sm:$0xff]
    %v255 = vld [vmem:[#allocation10 + $0xa0] sm:$0xff]
    %v256 = vld [vmem:[#allocation10 + $0xa8] sm:$0xff]
    %v257 = vld [vmem:[#allocation10 + $0xb0] sm:$0xff]
    %v258 = vld [vmem:[#allocation10 + $0xb8] sm:$0xff]
    %v259 = vld [vmem:[#allocation10 + $0xc0] sm:$0xff]
    %v260 = vld [vmem:[#allocation10 + $0xc8] sm:$0xff]
    %v261 = vld [vmem:[#allocation10 + $0xd0] sm:$0xff]
    %v262 = vld [vmem:[#allocation10 + $0xd8] sm:$0xff]
    %v263 = vld [vmem:[#allocation10 + $0xe0] sm:$0xff]
    %v264 = vld [vmem:[#allocation10 + $0xe8] sm:$0xff]
    %v265 = vld [vmem:[#allocation10 + $0xf0] sm:$0xff]
    %v266 = vld [vmem:[#allocation10 + $0xf8] sm:$0xff]
    %267 = vmatprep.subr.mxu0 %v236
    %268 = vmatpush1.msra.mxu0 %v235
    %269 = vmatprep.subr.mxu0 %v238
    %270 = vmatpush1.msra.mxu0 %v237
    %271 = vmatprep.subr.mxu0 %v240
    %272 = vmatpush1.msra.mxu0 %v239
    %273 = vmatprep.subr.mxu0 %v242
    %274 = vmatpush1.msra.mxu0 %v241
    %275 = vmatprep.subr.mxu0 %v244
    %276 = vmatpush1.msra.mxu0 %v243
    %277 = vmatprep.subr.mxu0 %v246
    %278 = vmatpush1.msra.mxu0 %v245
    %279 = vmatprep.subr.mxu0 %v248
    %280 = vmatpush1.msra.mxu0 %v247
    %281 = vmatprep.subr.mxu0 %v250
    %282 = vmatpush1.msra.mxu0 %v249
    %283 = vmatprep.subr.mxu0 %v252
    %284 = vmatpush1.msra.mxu0 %v251
    %285 = vmatprep.subr.mxu0 %v254
    %286 = vmatpush1.msra.mxu0 %v253
    %287 = vmatprep.subr.mxu0 %v256
    %288 = vmatpush1.msra.mxu0 %v255
    %289 = vmatprep.subr.mxu0 %v258
    %290 = vmatpush1.msra.mxu0 %v257
    %291 = vmatprep.subr.mxu0 %v260
    %292 = vmatpush1.msra.mxu0 %v259
    %293 = vmatprep.subr.mxu0 %v262
    %294 = vmatpush1.msra.mxu0 %v261
    %295 = vmatprep.subr.mxu0 %v264
    %296 = vmatpush1.msra.mxu0 %v263
    %297 = vmatprep.subr.mxu0 %v266
    %298 = vmatpush1.msra.mxu0 %v265
    %299 = vmatprep.subr.mxu0 0.0
    %300 = vmatpush1.msra.mxu0 0.0
    %301 = vmatprep.subr.mxu0 0.0
    %302 = vmatpush1.msra.mxu0 0.0
    %303 = vmatprep.subr.mxu0 0.0
    %304 = vmatpush1.msra.mxu0 0.0
    %305 = vmatprep.subr.mxu0 0.0
    %306 = vmatpush1.msra.mxu0 0.0
    %307 = vmatprep.subr.mxu0 0.0
    %308 = vmatpush1.msra.mxu0 0.0
    %309 = vmatprep.subr.mxu0 0.0
    %310 = vmatpush1.msra.mxu0 0.0
    %311 = vmatprep.subr.mxu0 0.0
    %312 = vmatpush1.msra.mxu0 0.0
    %313 = vmatprep.subr.mxu0 0.0
    %314 = vmatpush1.msra.mxu0 0.0
    %315 = vmatprep.subr.mxu0 0.0
    %316 = vmatpush1.msra.mxu0 0.0
    %317 = vmatprep.subr.mxu0 0.0
    %318 = vmatpush1.msra.mxu0 0.0
    %319 = vmatprep.subr.mxu0 0.0
    %320 = vmatpush1.msra.mxu0 0.0
    %321 = vmatprep.subr.mxu0 0.0
    %322 = vmatpush1.msra.mxu0 0.0
    %323 = vmatprep.subr.mxu0 0.0
    %324 = vmatpush1.msra.mxu0 0.0
    %325 = vmatprep.subr.mxu0 0.0
    %326 = vmatpush1.msra.mxu0 0.0
    %327 = vmatprep.subr.mxu0 0.0
    %328 = vmatpush1.msra.mxu0 0.0
    %329 = vmatprep.subr.mxu0 0.0
    %330 = vmatpush1.msra.mxu0 0.0
    %331 = vmatprep.mubr.f32.mxu0 0.0
    %332 = vmatmul.mubr.f32.gmra.mrb[0].mxu0 %v234
    %v333 = vpop.f32.mrb[0].mxu0
    %v334 = vadd.f32 0.0, %v333
    %v335 = vpop.f32.mrb[0].mxu0
    %v336 = vadd.f32 0.0, %v335
    %337 = vdwg.mxu0
    %s338 = smul.f32 %s117, %s118
    %v339 = vstv %s338
    %v340 = vmul.f32 %v339, %v334
    %v341 = vmul.f32 %v339, %v336
    %v342 = vadd.f32 %v340, %v159
    %v343 = vadd.f32 %v341, %v160
    %v344 = vld [vmem:[%s5] sm:$0xff]
    %v345 = vld [vmem:[%s5 + $0x8] sm:$0xff]
    %v346 = vld [vmem:[%s5 + $0x10] sm:$0x1]
    %v347 = vld [vmem:[%s5 + $0x18] sm:$0x1]
    %v348 = vld [vmem:[#allocation12] sm:$0xff]
    %v349 = vld [vmem:[#allocation12 + $0x8] sm:$0xff]
    %350 = vrot.lane.b32.xlu0 %v159, 17
    %v351 = vpop.permute.xlu0 %350
    %352 = vrot.lane.b32.xlu0 %v160, 17
    %v353 = vpop.permute.xlu0 %352
    %v354 = vlaneseq
    %v355 = vand.u32 %v354, 127
    %vm356 = vcmp.lt.s32.totalorder %v355, 17
    %v357 = vsel %vm356, %v351, %v353
    %v358 = vsel %vm356, %v353, %v351
    %v359 = vlaneseq
    %v360 = vshrl.u32 %v359, 7
    %v361 = vsub.s32 0, %v360
    %v362 = vrot.slane %v344, %v361
    %v363 = vlaneseq
    %v364 = vshrl.u32 %v363, 7
    %v365 = vsub.s32 0, %v364
    %v366 = vrot.slane %v345, %v365
    %v367 = vmul.f32 %v358, %v362
    %v368 = vmul.f32 %v357, %v366
    %369 = vrot.lane.b32.xlu0 %v159, 16
    %v370 = vpop.permute.xlu0 %369
    %371 = vrot.lane.b32.xlu0 %v160, 16
    %v372 = vpop.permute.xlu0 %371
    %vm373 = vcmp.lt.s32.totalorder %v355, 16
    %v374 = vsel %vm373, %v370, %v372
    %v375 = vsel %vm373, %v372, %v370
    %v376 = vlaneseq
    %v377 = vshrl.u32 %v376, 7
    %v378 = vsub.s32 1, %v377
    %v379 = vrot.slane %v344, %v378
    %v380 = vlaneseq
    %v381 = vshrl.u32 %v380, 7
    %v382 = vsub.s32 1, %v381
    %v383 = vrot.slane %v345, %v382
    %v384 = vmul.f32 %v375, %v379
    %v385 = vmul.f32 %v374, %v383
    %386 = vrot.lane.b32.xlu0 %v159, 15
    %v387 = vpop.permute.xlu0 %386
    %388 = vrot.lane.b32.xlu0 %v160, 15
    %v389 = vpop.permute.xlu0 %388
    %vm390 = vcmp.lt.s32.totalorder %v355, 15
    %v391 = vsel %vm390, %v387, %v389
    %v392 = vsel %vm390, %v389, %v387
    %v393 = vlaneseq
    %v394 = vshrl.u32 %v393, 7
    %v395 = vsub.s32 2, %v394
    %v396 = vrot.slane %v344, %v395
    %v397 = vlaneseq
    %v398 = vshrl.u32 %v397, 7
    %v399 = vsub.s32 2, %v398
    %v400 = vrot.slane %v345, %v399
    %v401 = vmul.f32 %v392, %v396
    %v402 = vmul.f32 %v391, %v400
    %403 = vrot.lane.b32.xlu0 %v159, 1
    %v404 = vpop.permute.xlu0 %403
    %405 = vrot.lane.b32.xlu0 %v160, 1
    %v406 = vpop.permute.xlu0 %405
    %vm407 = vcmp.lt.s32.totalorder %v355, 1
    %v408 = vsel %vm407, %v404, %v406
    %v409 = vsel %vm407, %v406, %v404
    %v410 = vlaneseq
    %v411 = vshrl.u32 %v410, 7
    %v412 = vsub.s32 3, %v411
    %v413 = vrot.slane %v344, %v412
    %v414 = vlaneseq
    %v415 = vshrl.u32 %v414, 7
    %v416 = vsub.s32 3, %v415
    %v417 = vrot.slane %v345, %v416
    %v418 = vmul.f32 %v409, %v413
    %v419 = vmul.f32 %v408, %v417
    %v420 = vlaneseq
    %v421 = vshrl.u32 %v420, 7
    %v422 = vsub.s32 4, %v421
    %v423 = vrot.slane %v344, %v422
    %v424 = vlaneseq
    %v425 = vshrl.u32 %v424, 7
    %v426 = vsub.s32 4, %v425
    %v427 = vrot.slane %v345, %v426
    %v430 = vcombine.low %v423, %v427
    %v432 = vunpack.c.l.s4 1983009808
    %v433 = vunpack.c.0.s8 %v432
    %v434 = vlaneseq
    %v435 = vshrl.u32 %v434, 7
    %v436 = vsub.s32 %v433, %v435
    %v437 = vrot.slane %v430, %v436
    %v439 = vmul.f32 %v119, %v437
    %440 = vrot.lane.b32.xlu0 %v159, 127
    %v441 = vpop.permute.xlu0 %440
    %442 = vrot.lane.b32.xlu0 %v160, 127
    %v443 = vpop.permute.xlu0 %442
    %vm444 = vcmp.lt.s32.totalorder %v355, 127
    %v445 = vsel %vm444, %v441, %v443
    %v446 = vsel %vm444, %v443, %v441
    %v447 = vlaneseq
    %v448 = vshrl.u32 %v447, 7
    %v449 = vsub.s32 5, %v448
    %v450 = vrot.slane %v344, %v449
    %v451 = vlaneseq
    %v452 = vshrl.u32 %v451, 7
    %v453 = vsub.s32 5, %v452
    %v454 = vrot.slane %v345, %v453
    %v455 = vmul.f32 %v445, %v450
    %v456 = vmul.f32 %v446, %v454
    %457 = vrot.lane.b32.xlu0 %v159, 113
    %v458 = vpop.permute.xlu0 %457
    %459 = vrot.lane.b32.xlu0 %v160, 113
    %v460 = vpop.permute.xlu0 %459
    %vm461 = vcmp.lt.s32.totalorder %v355, 113
    %v462 = vsel %vm461, %v458, %v460
    %v463 = vsel %vm461, %v460, %v458
    %v464 = vlaneseq
    %v465 = vshrl.u32 %v464, 7
    %v466 = vsub.s32 6, %v465
    %v467 = vrot.slane %v344, %v466
    %v468 = vlaneseq
    %v469 = vshrl.u32 %v468, 7
    %v470 = vsub.s32 6, %v469
    %v471 = vrot.slane %v345, %v470
    %v472 = vmul.f32 %v462, %v467
    %v473 = vmul.f32 %v463, %v471
    %474 = vrot.lane.b32.xlu0 %v159, 112
    %v475 = vpop.permute.xlu0 %474
    %476 = vrot.lane.b32.xlu0 %v160, 112
    %v477 = vpop.permute.xlu0 %476
    %vm478 = vcmp.lt.s32.totalorder %v355, 112
    %v479 = vsel %vm478, %v475, %v477
    %v480 = vsel %vm478, %v477, %v475
    %v481 = vlaneseq
    %v482 = vshrl.u32 %v481, 7
    %v483 = vsub.s32 7, %v482
    %v484 = vrot.slane %v344, %v483
    %v485 = vlaneseq
    %v486 = vshrl.u32 %v485, 7
    %v487 = vsub.s32 7, %v486
    %v488 = vrot.slane %v345, %v487
    %v489 = vmul.f32 %v479, %v484
    %v490 = vmul.f32 %v480, %v488
    %491 = vrot.lane.b32.xlu0 %v159, 111
    %v492 = vpop.permute.xlu0 %491
    %493 = vrot.lane.b32.xlu0 %v160, 111
    %v494 = vpop.permute.xlu0 %493
    %vm495 = vcmp.lt.s32.totalorder %v355, 111
    %v496 = vsel %vm495, %v492, %v494
    %v497 = vsel %vm495, %v494, %v492
    %v498 = vlaneseq
    %v499 = vshrl.u32 %v498, 7
    %v500 = vsub.s32 0, %v499
    %v501 = vrot.slane %v346, %v500
    %v502 = vlaneseq
    %v503 = vshrl.u32 %v502, 7
    %v504 = vsub.s32 0, %v503
    %v505 = vrot.slane %v347, %v504
    %v506 = vmul.f32 %v496, %v501
    %v507 = vmul.f32 %v497, %v505
    %v510 = vrot.slane %v384, 6
    %v511 = vrot.slane %v385, 6
    %v516 = vrot.slane %v401, 4
    %v517 = vrot.slane %v402, 4
    %v522 = vrot.slane %v418, 2
    %v523 = vrot.slane %v419, 2
    %v528 = vunpack.c.l.s4 1983009808
    %v529 = vunpack.c.0.s8 %v528
    %v530 = vlaneseq
    %v531 = vshrl.u32 %v530, 7
    %v532 = vsub.s32 %v529, %v531
    %v533 = vrot.slane %v439, %v532
    %v534 = vcombine.high %v533, %v533
    %v539 = vrot.slane %v455, 6
    %v540 = vrot.slane %v456, 6
    %v545 = vrot.slane %v472, 4
    %v546 = vrot.slane %v473, 4
    %v551 = vrot.slane %v489, 2
    %v552 = vrot.slane %v490, 2
    %vm555 = vcmask 1041408
    %v556 = vsel %vm555, %v367, %v510
    %v557 = vsel %vm555, %v368, %v511
    %vm558 = vcmask 1043456
    %v559 = vsel %vm558, %v556, %v516
    %v560 = vsel %vm558, %v557, %v517
    %vm561 = vcmask 1045504
    %v562 = vsel %vm561, %v559, %v522
    %v563 = vsel %vm561, %v560, %v523
    %v564 = vsel %vm555, %v533, %v539
    %v565 = vsel %vm555, %v534, %v540
    %v566 = vsel %vm558, %v564, %v545
    %v567 = vsel %vm558, %v565, %v546
    %v568 = vsel %vm561, %v566, %v551
    %v569 = vsel %vm561, %v567, %v552
    %v570 = vld [vmem:[%s7] sm:$0xff]
    %v571 = vld [vmem:[%s7 + $0x8] sm:$0xff]
    %573 = vset.pattern.permute.xlu0 0
    %574 = vperm.xlu0 %573, %v570
    %v575 = vpop.permute.xlu0 %574
    %578 = vset.pattern.permute.xlu0 0
    %579 = vperm.xlu0 %578, %v571
    %v580 = vpop.permute.xlu0 %579
    %vm582 = vcmask 146432
    %v584 = vsel %vm582, %v348, 0
    %v587 = vsel %vm582, %v349, 0
    %v590 = vsel %vm555, %v506, 0
    %v593 = vsel %vm555, %v507, 0
    %595 = vmatprep.subr.mxu0 %v563
    %596 = vmatpush1.msra.mxu0 %v562
    %597 = vmatprep.subr.mxu0 %v569
    %598 = vmatpush1.msra.mxu0 %v568
    %599 = vmatprep.subr.mxu0 %v593
    %600 = vmatpush1.msra.mxu0 %v590
    %601 = vmatprep.subr.mxu0 0.0
    %602 = vmatpush1.msra.mxu0 0.0
    %603 = vmatprep.subr.mxu0 0.0
    %604 = vmatpush1.msra.mxu0 0.0
    %605 = vmatprep.subr.mxu0 0.0
    %606 = vmatpush1.msra.mxu0 0.0
    %607 = vmatprep.subr.mxu0 0.0
    %608 = vmatpush1.msra.mxu0 0.0
    %609 = vmatprep.subr.mxu0 0.0
    %610 = vmatpush1.msra.mxu0 0.0
    %611 = vmatprep.subr.mxu0 0.0
    %612 = vmatpush1.msra.mxu0 0.0
    %613 = vmatprep.subr.mxu0 0.0
    %614 = vmatpush1.msra.mxu0 0.0
    %615 = vmatprep.subr.mxu0 0.0
    %616 = vmatpush1.msra.mxu0 0.0
    %617 = vmatprep.subr.mxu0 0.0
    %618 = vmatpush1.msra.mxu0 0.0
    %619 = vmatprep.subr.mxu0 0.0
    %620 = vmatpush1.msra.mxu0 0.0
    %621 = vmatprep.subr.mxu0 0.0
    %622 = vmatpush1.msra.mxu0 0.0
    %623 = vmatprep.subr.mxu0 0.0
    %624 = vmatpush1.msra.mxu0 0.0
    %625 = vmatprep.subr.mxu0 0.0
    %626 = vmatpush1.msra.mxu0 0.0
    %627 = vmatprep.subr.mxu0 0.0
    %628 = vmatpush1.msra.mxu0 0.0
    %629 = vmatprep.subr.mxu0 0.0
    %630 = vmatpush1.msra.mxu0 0.0
    %631 = vmatprep.subr.mxu0 0.0
    %632 = vmatpush1.msra.mxu0 0.0
    %633 = vmatprep.subr.mxu0 0.0
    %634 = vmatpush1.msra.mxu0 0.0
    %635 = vmatprep.subr.mxu0 0.0
    %636 = vmatpush1.msra.mxu0 0.0
    %637 = vmatprep.subr.mxu0 0.0
    %638 = vmatpush1.msra.mxu0 0.0
    %639 = vmatprep.subr.mxu0 0.0
    %640 = vmatpush1.msra.mxu0 0.0
    %641 = vmatprep.subr.mxu0 0.0
    %642 = vmatpush1.msra.mxu0 0.0
    %643 = vmatprep.subr.mxu0 0.0
    %644 = vmatpush1.msra.mxu0 0.0
    %645 = vmatprep.subr.mxu0 0.0
    %646 = vmatpush1.msra.mxu0 0.0
    %647 = vmatprep.subr.mxu0 0.0
    %648 = vmatpush1.msra.mxu0 0.0
    %649 = vmatprep.subr.mxu0 0.0
    %650 = vmatpush1.msra.mxu0 0.0
    %651 = vmatprep.subr.mxu0 0.0
    %652 = vmatpush1.msra.mxu0 0.0
    %653 = vmatprep.subr.mxu0 0.0
    %654 = vmatpush1.msra.mxu0 0.0
    %655 = vmatprep.subr.mxu0 0.0
    %656 = vmatpush1.msra.mxu0 0.0
    %657 = vmatprep.subr.mxu0 0.0
    %658 = vmatpush1.msra.mxu0 0.0
    %659 = vmatprep.mubr.f32.mxu0 0.0
    %660 = vmatmul.mubr.f32.gmra.mrb[0].mxu0 %v584
    %v661 = vpop.f32.mrb[0].mxu0
    %v662 = vadd.f32 %v575, %v661
    %v663 = vpop.f32.mrb[0].mxu0
    %v664 = vadd.f32 %v575, %v663
    %665 = vmatprep.mubr.f32.mxu0 0.0
    %666 = vmatmul.mubr.f32.gmra.mrb[0].mxu0 %v587
    %v667 = vpop.f32.mrb[0].mxu0
    %v668 = vadd.f32 %v580, %v667
    %v669 = vpop.f32.mrb[0].mxu0
    %v670 = vadd.f32 %v580, %v669
    %671 = vdwg.mxu0
    %v672 = vmax.f32 %v662, 0.0
    %v673 = vmax.f32 %v664, 0.0
    %v674 = vmax.f32 %v668, 0.0
    %v675 = vmax.f32 %v670, 0.0
    %v676 = vld [vmem:[%s8] sm:$0xff]
    %v677 = vld [vmem:[%s8 + $0x8] sm:$0xff]
    %v678 = vld [vmem:[%s8 + $0x10] sm:$0xff]
    %v679 = vld [vmem:[%s8 + $0x18] sm:$0xff]
    %680 = vrot.lane.b32.xlu0 %v672, 17
    %v681 = vpop.permute.xlu0 %680
    %682 = vrot.lane.b32.xlu0 %v674, 17
    %v683 = vpop.permute.xlu0 %682
    %684 = vrot.lane.b32.xlu0 %v673, 17
    %v685 = vpop.permute.xlu0 %684
    %686 = vrot.lane.b32.xlu0 %v675, 17
    %v687 = vpop.permute.xlu0 %686
    %v688 = vsel %vm356, %v681, %v685
    %v689 = vsel %vm356, %v683, %v687
    %v690 = vsel %vm356, %v685, %v681
    %v691 = vsel %vm356, %v687, %v683
    %v692 = vmul.f32 %v690, %v362
    %v693 = vmul.f32 %v688, %v366
    %v694 = vmul.f32 %v691, %v362
    %v695 = vmul.f32 %v689, %v366
    %696 = vrot.lane.b32.xlu0 %v672, 16
    %v697 = vpop.permute.xlu0 %696
    %698 = vrot.lane.b32.xlu0 %v674, 16
    %v699 = vpop.permute.xlu0 %698
    %700 = vrot.lane.b32.xlu0 %v673, 16
    %v701 = vpop.permute.xlu0 %700
    %702 = vrot.lane.b32.xlu0 %v675, 16
    %v703 = vpop.permute.xlu0 %702
    %v704 = vsel %vm373, %v697, %v701
    %v705 = vsel %vm373, %v699, %v703
    %v706 = vsel %vm373, %v701, %v697
    %v707 = vsel %vm373, %v703, %v699
    %v708 = vmul.f32 %v706, %v379
    %v709 = vmul.f32 %v704, %v383
    %v710 = vmul.f32 %v707, %v379
    %v711 = vmul.f32 %v705, %v383
    %712 = vrot.lane.b32.xlu0 %v672, 15
    %v713 = vpop.permute.xlu0 %712
    %714 = vrot.lane.b32.xlu0 %v674, 15
    %v715 = vpop.permute.xlu0 %714
    %716 = vrot.lane.b32.xlu0 %v673, 15
    %v717 = vpop.permute.xlu0 %716
    %718 = vrot.lane.b32.xlu0 %v675, 15
    %v719 = vpop.permute.xlu0 %718
    %v720 = vsel %vm390, %v713, %v717
    %v721 = vsel %vm390, %v715, %v719
    %v722 = vsel %vm390, %v717, %v713
    %v723 = vsel %vm390, %v719, %v715
    %v724 = vmul.f32 %v722, %v396
    %v725 = vmul.f32 %v720, %v400
    %v726 = vmul.f32 %v723, %v396
    %v727 = vmul.f32 %v721, %v400
    %728 = vrot.lane.b32.xlu0 %v672, 1
    %v729 = vpop.permute.xlu0 %728
    %730 = vrot.lane.b32.xlu0 %v674, 1
    %v731 = vpop.permute.xlu0 %730
    %732 = vrot.lane.b32.xlu0 %v673, 1
    %v733 = vpop.permute.xlu0 %732
    %734 = vrot.lane.b32.xlu0 %v675, 1
    %v735 = vpop.permute.xlu0 %734
    %v736 = vsel %vm407, %v729, %v733
    %v737 = vsel %vm407, %v731, %v735
    %v738 = vsel %vm407, %v733, %v729
    %v739 = vsel %vm407, %v735, %v731
    %v740 = vmul.f32 %v738, %v413
    %v741 = vmul.f32 %v736, %v417
    %v742 = vmul.f32 %v739, %v413
    %v743 = vmul.f32 %v737, %v417
    %v744 = vmul.f32 %v672, %v423
    %v745 = vmul.f32 %v673, %v427
    %v746 = vmul.f32 %v674, %v423
    %v747 = vmul.f32 %v675, %v427
    %748 = vrot.lane.b32.xlu0 %v672, 127
    %v749 = vpop.permute.xlu0 %748
    %750 = vrot.lane.b32.xlu0 %v674, 127
    %v751 = vpop.permute.xlu0 %750
    %752 = vrot.lane.b32.xlu0 %v673, 127
    %v753 = vpop.permute.xlu0 %752
    %754 = vrot.lane.b32.xlu0 %v675, 127
    %v755 = vpop.permute.xlu0 %754
    %v756 = vsel %vm444, %v749, %v753
    %v757 = vsel %vm444, %v751, %v755
    %v758 = vsel %vm444, %v753, %v749
    %v759 = vsel %vm444, %v755, %v751
    %v760 = vmul.f32 %v756, %v450
    %v761 = vmul.f32 %v758, %v454
    %v762 = vmul.f32 %v757, %v450
    %v763 = vmul.f32 %v759, %v454
    %764 = vrot.lane.b32.xlu0 %v672, 113
    %v765 = vpop.permute.xlu0 %764
    %766 = vrot.lane.b32.xlu0 %v674, 113
    %v767 = vpop.permute.xlu0 %766
    %768 = vrot.lane.b32.xlu0 %v673, 113
    %v769 = vpop.permute.xlu0 %768
    %770 = vrot.lane.b32.xlu0 %v675, 113
    %v771 = vpop.permute.xlu0 %770
    %v772 = vsel %vm461, %v765, %v769
    %v773 = vsel %vm461, %v767, %v771
    %v774 = vsel %vm461, %v769, %v765
    %v775 = vsel %vm461, %v771, %v767
    %v776 = vmul.f32 %v772, %v467
    %v777 = vmul.f32 %v774, %v471
    %v778 = vmul.f32 %v773, %v467
    %v779 = vmul.f32 %v775, %v471
    %780 = vrot.lane.b32.xlu0 %v672, 112
    %v781 = vpop.permute.xlu0 %780
    %782 = vrot.lane.b32.xlu0 %v674, 112
    %v783 = vpop.permute.xlu0 %782
    %784 = vrot.lane.b32.xlu0 %v673, 112
    %v785 = vpop.permute.xlu0 %784
    %786 = vrot.lane.b32.xlu0 %v675, 112
    %v787 = vpop.permute.xlu0 %786
    %v788 = vsel %vm478, %v781, %v785
    %v789 = vsel %vm478, %v783, %v787
    %v790 = vsel %vm478, %v785, %v781
    %v791 = vsel %vm478, %v787, %v783
    %v792 = vmul.f32 %v788, %v484
    %v793 = vmul.f32 %v790, %v488
    %v794 = vmul.f32 %v789, %v484
    %v795 = vmul.f32 %v791, %v488
    %796 = vrot.lane.b32.xlu0 %v672, 111
    %v797 = vpop.permute.xlu0 %796
    %798 = vrot.lane.b32.xlu0 %v674, 111
    %v799 = vpop.permute.xlu0 %798
    %800 = vrot.lane.b32.xlu0 %v673, 111
    %v801 = vpop.permute.xlu0 %800
    %802 = vrot.lane.b32.xlu0 %v675, 111
    %v803 = vpop.permute.xlu0 %802
    %v804 = vsel %vm495, %v797, %v801
    %v805 = vsel %vm495, %v799, %v803
    %v806 = vsel %vm495, %v801, %v797
    %v807 = vsel %vm495, %v803, %v799
    %v808 = vmul.f32 %v804, %v501
    %v809 = vmul.f32 %v806, %v505
    %v810 = vmul.f32 %v805, %v501
    %v811 = vmul.f32 %v807, %v505
    %v812 = vld [vmem:[%s9] sm:$0xff]
    %v813 = vld [vmem:[%s9 + $0x8] sm:$0xff]
    %815 = vset.pattern.permute.xlu0 0
    %816 = vperm.xlu0 %815, %v812
    %v817 = vpop.permute.xlu0 %816
    %820 = vset.pattern.permute.xlu0 0
    %821 = vperm.xlu0 %820, %v813
    %v822 = vpop.permute.xlu0 %821
    %vm824 = vcmask 130048
    %v826 = vsel %vm824, %v677, 0
    %v829 = vsel %vm824, %v679, 0
    %831 = vmatprep.subr.mxu0 %v693
    %832 = vmatpush1.msra.mxu0 %v692
    %833 = vmatprep.subr.mxu0 %v695
    %834 = vmatpush1.msra.mxu0 %v694
    %835 = vmatprep.subr.mxu0 %v709
    %836 = vmatpush1.msra.mxu0 %v708
    %837 = vmatprep.subr.mxu0 %v711
    %838 = vmatpush1.msra.mxu0 %v710
    %839 = vmatprep.subr.mxu0 %v725
    %840 = vmatpush1.msra.mxu0 %v724
    %841 = vmatprep.subr.mxu0 %v727
    %842 = vmatpush1.msra.mxu0 %v726
    %843 = vmatprep.subr.mxu0 %v741
    %844 = vmatpush1.msra.mxu0 %v740
    %845 = vmatprep.subr.mxu0 %v743
    %846 = vmatpush1.msra.mxu0 %v742
    %847 = vmatprep.subr.mxu0 %v745
    %848 = vmatpush1.msra.mxu0 %v744
    %849 = vmatprep.subr.mxu0 %v747
    %850 = vmatpush1.msra.mxu0 %v746
    %851 = vmatprep.subr.mxu0 %v761
    %852 = vmatpush1.msra.mxu0 %v760
    %853 = vmatprep.subr.mxu0 %v763
    %854 = vmatpush1.msra.mxu0 %v762
    %855 = vmatprep.subr.mxu0 %v777
    %856 = vmatpush1.msra.mxu0 %v776
    %857 = vmatprep.subr.mxu0 %v779
    %858 = vmatpush1.msra.mxu0 %v778
    %859 = vmatprep.subr.mxu0 %v793
    %860 = vmatpush1.msra.mxu0 %v792
    %861 = vmatprep.subr.mxu0 %v795
    %862 = vmatpush1.msra.mxu0 %v794
    %863 = vmatprep.subr.mxu0 %v809
    %864 = vmatpush1.msra.mxu0 %v808
    %865 = vmatprep.subr.mxu0 %v811
    %866 = vmatpush1.msra.mxu0 %v810
    %867 = vmatprep.subr.mxu0 0.0
    %868 = vmatpush1.msra.mxu0 0.0
    %869 = vmatprep.subr.mxu0 0.0
    %870 = vmatpush1.msra.mxu0 0.0
    %871 = vmatprep.subr.mxu0 0.0
    %872 = vmatpush1.msra.mxu0 0.0
    %873 = vmatprep.subr.mxu0 0.0
    %874 = vmatpush1.msra.mxu0 0.0
    %875 = vmatprep.subr.mxu0 0.0
    %876 = vmatpush1.msra.mxu0 0.0
    %877 = vmatprep.subr.mxu0 0.0
    %878 = vmatpush1.msra.mxu0 0.0
    %879 = vmatprep.subr.mxu0 0.0
    %880 = vmatpush1.msra.mxu0 0.0
    %881 = vmatprep.subr.mxu0 0.0
    %882 = vmatpush1.msra.mxu0 0.0
    %883 = vmatprep.subr.mxu0 0.0
    %884 = vmatpush1.msra.mxu0 0.0
    %885 = vmatprep.subr.mxu0 0.0
    %886 = vmatpush1.msra.mxu0 0.0
    %887 = vmatprep.subr.mxu0 0.0
    %888 = vmatpush1.msra.mxu0 0.0
    %889 = vmatprep.subr.mxu0 0.0
    %890 = vmatpush1.msra.mxu0 0.0
    %891 = vmatprep.subr.mxu0 0.0
    %892 = vmatpush1.msra.mxu0 0.0
    %893 = vmatprep.subr.mxu0 0.0
    %894 = vmatpush1.msra.mxu0 0.0
    %895 = vmatprep.mubr.f32.mxu0 %v826
    %896 = vmatmul.mubr.f32.gmra.mrb[0].mxu0 %v676
    %v897 = vpop.f32.mrb[0].mxu0
    %v898 = vadd.f32 %v817, %v897
    %v899 = vpop.f32.mrb[0].mxu0
    %v900 = vadd.f32 %v817, %v899
    %901 = vmatprep.mubr.f32.mxu0 %v829
    %902 = vmatmul.mubr.f32.gmra.mrb[0].mxu0 %v678
    %v903 = vpop.f32.mrb[0].mxu0
    %v904 = vadd.f32 %v822, %v903
    %v905 = vpop.f32.mrb[0].mxu0
    %v906 = vadd.f32 %v822, %v905
    %907 = vdwg.mxu0
    %v908 = vmax.f32 %v898, 0.0
    %v909 = vmax.f32 %v900, 0.0
    %v910 = vmax.f32 %v904, 0.0
    %v911 = vmax.f32 %v906, 0.0
    %v912 = vld [vmem:[%s10] sm:$0xf]
    %913 = vrot.lane.b32.xlu0 %v908, 17
    %v914 = vpop.permute.xlu0 %913
    %915 = vrot.lane.b32.xlu0 %v910, 17
    %v916 = vpop.permute.xlu0 %915
    %917 = vrot.lane.b32.xlu0 %v909, 17
    %v918 = vpop.permute.xlu0 %917
    %919 = vrot.lane.b32.xlu0 %v911, 17
    %v920 = vpop.permute.xlu0 %919
    %v921 = vsel %vm356, %v914, %v918
    %v922 = vsel %vm356, %v916, %v920
    %v923 = vsel %vm356, %v918, %v914
    %v924 = vsel %vm356, %v920, %v916
    %v925 = vmul.f32 %v923, %v362
    %v926 = vmul.f32 %v921, %v366
    %v927 = vmul.f32 %v924, %v362
    %v928 = vmul.f32 %v922, %v366
    %929 = vrot.lane.b32.xlu0 %v908, 16
    %v930 = vpop.permute.xlu0 %929
    %931 = vrot.lane.b32.xlu0 %v910, 16
    %v932 = vpop.permute.xlu0 %931
    %933 = vrot.lane.b32.xlu0 %v909, 16
    %v934 = vpop.permute.xlu0 %933
    %935 = vrot.lane.b32.xlu0 %v911, 16
    %v936 = vpop.permute.xlu0 %935
    %v937 = vsel %vm373, %v930, %v934
    %v938 = vsel %vm373, %v932, %v936
    %v939 = vsel %vm373, %v934, %v930
    %v940 = vsel %vm373, %v936, %v932
    %v941 = vmul.f32 %v939, %v379
    %v942 = vmul.f32 %v937, %v383
    %v943 = vmul.f32 %v940, %v379
    %v944 = vmul.f32 %v938, %v383
    %945 = vrot.lane.b32.xlu0 %v908, 15
    %v946 = vpop.permute.xlu0 %945
    %947 = vrot.lane.b32.xlu0 %v910, 15
    %v948 = vpop.permute.xlu0 %947
    %949 = vrot.lane.b32.xlu0 %v909, 15
    %v950 = vpop.permute.xlu0 %949
    %951 = vrot.lane.b32.xlu0 %v911, 15
    %v952 = vpop.permute.xlu0 %951
    %v953 = vsel %vm390, %v946, %v950
    %v954 = vsel %vm390, %v948, %v952
    %v955 = vsel %vm390, %v950, %v946
    %v956 = vsel %vm390, %v952, %v948
    %v957 = vmul.f32 %v955, %v396
    %v958 = vmul.f32 %v953, %v400
    %v959 = vmul.f32 %v956, %v396
    %v960 = vmul.f32 %v954, %v400
    %961 = vrot.lane.b32.xlu0 %v908, 1
    %v962 = vpop.permute.xlu0 %961
    %963 = vrot.lane.b32.xlu0 %v910, 1
    %v964 = vpop.permute.xlu0 %963
    %965 = vrot.lane.b32.xlu0 %v909, 1
    %v966 = vpop.permute.xlu0 %965
    %967 = vrot.lane.b32.xlu0 %v911, 1
    %v968 = vpop.permute.xlu0 %967
    %v969 = vsel %vm407, %v962, %v966
    %v970 = vsel %vm407, %v964, %v968
    %v971 = vsel %vm407, %v966, %v962
    %v972 = vsel %vm407, %v968, %v964
    %v973 = vmul.f32 %v971, %v413
    %v974 = vmul.f32 %v969, %v417
    %v975 = vmul.f32 %v972, %v413
    %v976 = vmul.f32 %v970, %v417
    %v977 = vmul.f32 %v908, %v423
    %v978 = vmul.f32 %v909, %v427
    %v979 = vmul.f32 %v910, %v423
    %v980 = vmul.f32 %v911, %v427
    %981 = vrot.lane.b32.xlu0 %v908, 127
    %v982 = vpop.permute.xlu0 %981
    %983 = vrot.lane.b32.xlu0 %v910, 127
    %v984 = vpop.permute.xlu0 %983
    %985 = vrot.lane.b32.xlu0 %v909, 127
    %v986 = vpop.permute.xlu0 %985
    %987 = vrot.lane.b32.xlu0 %v911, 127
    %v988 = vpop.permute.xlu0 %987
    %v989 = vsel %vm444, %v982, %v986
    %v990 = vsel %vm444, %v984, %v988
    %v991 = vsel %vm444, %v986, %v982
    %v992 = vsel %vm444, %v988, %v984
    %v993 = vmul.f32 %v989, %v450
    %v994 = vmul.f32 %v991, %v454
    %v995 = vmul.f32 %v990, %v450
    %v996 = vmul.f32 %v992, %v454
    %997 = vrot.lane.b32.xlu0 %v908, 113
    %v998 = vpop.permute.xlu0 %997
    %999 = vrot.lane.b32.xlu0 %v910, 113
    %v1000 = vpop.permute.xlu0 %999
    %1001 = vrot.lane.b32.xlu0 %v909, 113
    %v1002 = vpop.permute.xlu0 %1001
    %1003 = vrot.lane.b32.xlu0 %v911, 113
    %v1004 = vpop.permute.xlu0 %1003
    %v1005 = vsel %vm461, %v998, %v1002
    %v1006 = vsel %vm461, %v1000, %v1004
    %v1007 = vsel %vm461, %v1002, %v998
    %v1008 = vsel %vm461, %v1004, %v1000
    %v1009 = vmul.f32 %v1005, %v467
    %v1010 = vmul.f32 %v1007, %v471
    %v1011 = vmul.f32 %v1006, %v467
    %v1012 = vmul.f32 %v1008, %v471
    %1013 = vrot.lane.b32.xlu0 %v908, 112
    %v1014 = vpop.permute.xlu0 %1013
    %1015 = vrot.lane.b32.xlu0 %v910, 112
    %v1016 = vpop.permute.xlu0 %1015
    %1017 = vrot.lane.b32.xlu0 %v909, 112
    %v1018 = vpop.permute.xlu0 %1017
    %1019 = vrot.lane.b32.xlu0 %v911, 112
    %v1020 = vpop.permute.xlu0 %1019
    %v1021 = vsel %vm478, %v1014, %v1018
    %v1022 = vsel %vm478, %v1016, %v1020
    %v1023 = vsel %vm478, %v1018, %v1014
    %v1024 = vsel %vm478, %v1020, %v1016
    %v1025 = vmul.f32 %v1021, %v484
    %v1026 = vmul.f32 %v1023, %v488
    %v1027 = vmul.f32 %v1022, %v484
    %v1028 = vmul.f32 %v1024, %v488
    %1029 = vrot.lane.b32.xlu0 %v908, 111
    %v1030 = vpop.permute.xlu0 %1029
    %1031 = vrot.lane.b32.xlu0 %v910, 111
    %v1032 = vpop.permute.xlu0 %1031
    %1033 = vrot.lane.b32.xlu0 %v909, 111
    %v1034 = vpop.permute.xlu0 %1033
    %1035 = vrot.lane.b32.xlu0 %v911, 111
    %v1036 = vpop.permute.xlu0 %1035
    %v1037 = vsel %vm495, %v1030, %v1034
    %v1038 = vsel %vm495, %v1032, %v1036
    %v1039 = vsel %vm495, %v1034, %v1030
    %v1040 = vsel %vm495, %v1036, %v1032
    %v1041 = vmul.f32 %v1037, %v501
    %v1042 = vmul.f32 %v1039, %v505
    %v1043 = vmul.f32 %v1038, %v501
    %v1044 = vmul.f32 %v1040, %v505
    %v1045 = vld [vmem:[%s11] sm:$0x3]
    %1047 = vset.pattern.permute.xlu0 0
    %1048 = vperm.xlu0 %1047, %v1045
    %v1049 = vpop.permute.xlu0 %1048
    %v1053 = vunpack.c.l.s4 1983009808
    %v1054 = vunpack.c.0.s8 %v1053
    %v1055 = vlaneseq
    %v1056 = vshrl.u32 %v1055, 7
    %v1057 = vsub.s32 %v1054, %v1056
    %v1058 = vrot.slane %v912, %v1057
    %v1059 = vcombine.high %v1058, %v1058
    %v1061 = vsel %vm824, %v1059, 0
    %1063 = vmatprep.subr.mxu0 %v926
    %1064 = vmatpush1.msra.mxu0 %v925
    %1065 = vmatprep.subr.mxu0 %v928
    %1066 = vmatpush1.msra.mxu0 %v927
    %1067 = vmatprep.subr.mxu0 %v942
    %1068 = vmatpush1.msra.mxu0 %v941
    %1069 = vmatprep.subr.mxu0 %v944
    %1070 = vmatpush1.msra.mxu0 %v943
    %1071 = vmatprep.subr.mxu0 %v958
    %1072 = vmatpush1.msra.mxu0 %v957
    %1073 = vmatprep.subr.mxu0 %v960
    %1074 = vmatpush1.msra.mxu0 %v959
    %1075 = vmatprep.subr.mxu0 %v974
    %1076 = vmatpush1.msra.mxu0 %v973
    %1077 = vmatprep.subr.mxu0 %v976
    %1078 = vmatpush1.msra.mxu0 %v975
    %1079 = vmatprep.subr.mxu0 %v978
    %1080 = vmatpush1.msra.mxu0 %v977
    %1081 = vmatprep.subr.mxu0 %v980
    %1082 = vmatpush1.msra.mxu0 %v979
    %1083 = vmatprep.subr.mxu0 %v994
    %1084 = vmatpush1.msra.mxu0 %v993
    %1085 = vmatprep.subr.mxu0 %v996
    %1086 = vmatpush1.msra.mxu0 %v995
    %1087 = vmatprep.subr.mxu0 %v1010
    %1088 = vmatpush1.msra.mxu0 %v1009
    %1089 = vmatprep.subr.mxu0 %v1012
    %1090 = vmatpush1.msra.mxu0 %v1011
    %1091 = vmatprep.subr.mxu0 %v1026
    %1092 = vmatpush1.msra.mxu0 %v1025
    %1093 = vmatprep.subr.mxu0 %v1028
    %1094 = vmatpush1.msra.mxu0 %v1027
    %1095 = vmatprep.subr.mxu0 %v1042
    %1096 = vmatpush1.msra.mxu0 %v1041
    %1097 = vmatprep.subr.mxu0 %v1044
    %1098 = vmatpush1.msra.mxu0 %v1043
    %1099 = vmatprep.subr.mxu0 0.0
    %1100 = vmatpush1.msra.mxu0 0.0
    %1101 = vmatprep.subr.mxu0 0.0
    %1102 = vmatpush1.msra.mxu0 0.0
    %1103 = vmatprep.subr.mxu0 0.0
    %1104 = vmatpush1.msra.mxu0 0.0
    %1105 = vmatprep.subr.mxu0 0.0
    %1106 = vmatpush1.msra.mxu0 0.0
    %1107 = vmatprep.subr.mxu0 0.0
    %1108 = vmatpush1.msra.mxu0 0.0
    %1109 = vmatprep.subr.mxu0 0.0
    %1110 = vmatpush1.msra.mxu0 0.0
    %1111 = vmatprep.subr.mxu0 0.0
    %1112 = vmatpush1.msra.mxu0 0.0
    %1113 = vmatprep.subr.mxu0 0.0
    %1114 = vmatpush1.msra.mxu0 0.0
    %1115 = vmatprep.subr.mxu0 0.0
    %1116 = vmatpush1.msra.mxu0 0.0
    %1117 = vmatprep.subr.mxu0 0.0
    %1118 = vmatpush1.msra.mxu0 0.0
    %1119 = vmatprep.subr.mxu0 0.0
    %1120 = vmatpush1.msra.mxu0 0.0
    %1121 = vmatprep.subr.mxu0 0.0
    %1122 = vmatpush1.msra.mxu0 0.0
    %1123 = vmatprep.subr.mxu0 0.0
    %1124 = vmatpush1.msra.mxu0 0.0
    %1125 = vmatprep.subr.mxu0 0.0
    %1126 = vmatpush1.msra.mxu0 0.0
    %1127 = vmatprep.mubr.f32.mxu0 %v1061
    %1128 = vmatmul.mubr.f32.gmra.mrb[0].mxu0 %v1058
    %v1129 = vpop.f32.mrb[0].mxu0
    %v1130 = vadd.f32 %v1049, %v1129
    %v1131 = vpop.f32.mrb[0].mxu0
    %v1132 = vadd.f32 %v1049, %v1131
    %1133 = vdwg.mxu0
    %v1134 = vadd.f32 %v342, %v1130
    %v1135 = vadd.f32 %v343, %v1132
    %v1136 = vmax.f32 %v1134, 0.0
    %v1137 = vmax.f32 %v1135, 0.0
    %v1140 = vcombine.low %v1136, %v1137
    %v1142 = vunpack.c.l.s4 1983009808
    %v1143 = vunpack.c.0.s8 %v1142
    %v1144 = vlaneseq
    %v1145 = vshrl.u32 %v1144, 7
    %v1146 = vsub.s32 %v1143, %v1145
    %v1147 = vrot.slane %v1140, %v1146
    %1149 = vst [vmem:[#allocation13] sm:$0xf] %v1147
    // Predicated region
    $region74: #{tpu_custom_call.1} parent=1 // pred_check
      _
    $region75: #{tpu_custom_call.1} parent=1 // pred_check_branch
      %1151 = sbr.rel (0) target = $region77
    $region76: #{tpu_custom_call.1} parent=1 // pred_region
      %s1153 = ssub.s32 64, 64
      %1154 = vsyncadd [#allocation4], %s1153
      %s1156 = sshll.u32 [#allocation13], 4
      %s1157 = int_to_ptr.vmem [resolvable:$true] %s1156
      %1159 = dma.vmem_to_hbm [thread:$0]  %s1157, 64, %s12, [#allocation4]
    $region77: #{tpu_custom_call.1} parent=1 // pred_fallthru
      _
    // Predicated region
    $region78: #{tpu_custom_call.1} parent=1 // pred_check
      _
    $region79: #{tpu_custom_call.1} parent=1 // pred_check_branch
      %1161 = sbr.rel (0) target = $region81
    $region80: #{tpu_custom_call.1} parent=1 // pred_region
      %1162 = dma.done [#allocation4], 64
    $region81: #{tpu_custom_call.1} parent=1 // pred_fallthru
      _
    %1163 = vsyncpa [#allocation3], 1
    %1164 = vsyncpa [#allocation8], 1
    %1165 = vsyncpa [#allocation11], 1
    %1166 = vsyncpa [#allocation4], 1
    %1167 = vsyncpa [#allocation5], 1

</llo_original>
